<compile_context>
chip_gen: v5e
topology: v5e:2x2
jax: 0.10.0
libtpu: 0.0.40
codegen_flags: <defaults>
</compile_context>

<pallas_src>
import functools

import jax
import jax.numpy as jnp
from jax import lax
from jax.experimental import pallas as pl
from jax.experimental.pallas import tpu as pltpu

EPS = 1e-5
VMEM_LIMIT = 64 << 20   # raise scoped-VMEM cap above the 16/32 MiB defaults


def _instance_norm_rows(z, apply_relu):
    """InstanceNorm2d (affine=False, biased var, eps=1e-5) over the lane (H*W) axis."""
    mean = jnp.mean(z, axis=-1, keepdims=True)
    d = z - mean
    var = jnp.mean(d * d, axis=-1, keepdims=True)
    y = d * lax.rsqrt(var + EPS)
    if apply_relu:
        y = jnp.maximum(y, 0.0)
    return y


# ----------------------------------------------------------------------------
# Pallas kernels
# ----------------------------------------------------------------------------
def _edge_branch_kernel(patch_ref, w_ref, o_ref, *, num_filters):
    """patch:(1,KCp,HW)  w:(F,ot,KCp)  out:(1,ot,HW) = mean_g ReLU(IN(W_g @ patch))."""
    patch = patch_ref[0]                                    # (KCp, HW)
    acc = jnp.zeros(o_ref.shape[1:], jnp.float32)           # (ot, HW)
    for g in range(num_filters):                            # static unroll
        z = jnp.dot(w_ref[g], patch, preferred_element_type=jnp.float32)
        acc = acc + _instance_norm_rows(z, apply_relu=True)
    o_ref[0] = (acc * (1.0 / num_filters)).astype(o_ref.dtype)


def _conv_in_kernel(patch_ref, w_ref, o_ref, *, apply_relu):
    """patch:(1,KCp,HW)  w:(ot,KCp)  out:(1,ot,HW) = [ReLU](IN(W @ patch))."""
    z = jnp.dot(w_ref[...], patch_ref[0], preferred_element_type=jnp.float32)
    o_ref[0] = _instance_norm_rows(z, apply_relu).astype(o_ref.dtype)


def _conv_in_combine_kernel(patch_ref, w_ref, x_ref, pre_ref, o_ref):
    """out = x + pre + IN(W @ patch)  (residual combine fused into 2nd conv)."""
    z = jnp.dot(w_ref[...], patch_ref[0], preferred_element_type=jnp.float32)
    cb = _instance_norm_rows(z, apply_relu=False)
    o_ref[0] = (x_ref[0] + pre_ref[0] + cb).astype(o_ref.dtype)


# ----------------------------------------------------------------------------
# Wrapper helpers
# ----------------------------------------------------------------------------
def _round_up(v, m):
    return ((v + m - 1) // m) * m


def _pick_o_tile(o):
    if o <= 256:
        return o
    for t in (256, 128, 64, 32, 16, 8):
        if o % t == 0:
            return t
    return o


def _im2col(xpad, H, W, kc_pad):
    """(N, C, H+2, W+2) -> (N, kc_pad, H*W) patches, tap-major / channel-minor."""
    N, C, _, _ = xpad.shape
    cols = []
    for kh in range(3):
        for kw in range(3):
            cols.append(xpad[:, :, kh:kh + H, kw:kw + W].reshape(N, C, H * W))
    patches = jnp.concatenate(cols, axis=1)                 # (N, 9C, HW)
    return jnp.pad(patches, ((0, 0), (0, kc_pad - 9 * C), (0, 0)))


def _weight_to_mat(w, kc_pad):
    """(O, C, 3, 3) -> (O, kc_pad), matching the im2col tap-major ordering."""
    O, C, _, _ = w.shape
    wm = jnp.transpose(w, (0, 2, 3, 1)).reshape(O, 9 * C)
    return jnp.pad(wm, ((0, 0), (0, kc_pad - 9 * C)))


def _compiler_params():
    return pltpu.CompilerParams(
        dimension_semantics=("parallel", "parallel"),
        vmem_limit_bytes=VMEM_LIMIT)


# ----------------------------------------------------------------------------
# pallas_call wrappers
# ----------------------------------------------------------------------------
def fused_edge_branches(patches, w_stack):
    """patches:(N,KCp,HW)  w_stack:(F,O,KCp)  ->  pre:(N,O,HW)."""
    N, KCp, HW = patches.shape
    F, O, _ = w_stack.shape
    ot = _pick_o_tile(O)
    kernel = functools.partial(_edge_branch_kernel, num_filters=F)
    return pl.pallas_call(
        kernel,
        out_shape=jax.ShapeDtypeStruct((N, O, HW), jnp.float32),
        grid=(N, O // ot),
        in_specs=[
            pl.BlockSpec((1, KCp, HW), lambda n, o: (n, 0, 0)),
            pl.BlockSpec((F, ot, KCp), lambda n, o: (0, o, 0)),
        ],
        out_specs=pl.BlockSpec((1, ot, HW), lambda n, o: (n, o, 0)),
        compiler_params=_compiler_params(),
    )(patches, w_stack)


def conv3x3_instancenorm(patches, w_mat, *, apply_relu):
    """patches:(N,KCp,HW)  w_mat:(O,KCp)  ->  (N,O,HW)."""
    N, KCp, HW = patches.shape
    O = w_mat.shape[0]
    ot = _pick_o_tile(O)
    kernel = functools.partial(_conv_in_kernel, apply_relu=apply_relu)
    return pl.pallas_call(
        kernel,
        out_shape=jax.ShapeDtypeStruct((N, O, HW), jnp.float32),
        grid=(N, O // ot),
        in_specs=[
            pl.BlockSpec((1, KCp, HW), lambda n, o: (n, 0, 0)),
            pl.BlockSpec((ot, KCp), lambda n, o: (o, 0)),
        ],
        out_specs=pl.BlockSpec((1, ot, HW), lambda n, o: (n, o, 0)),
        compiler_params=_compiler_params(),
    )(patches, w_mat)


def conv3x3_in_combine(patches, w_mat, x_flat, pre):
    """(x + pre + IN(conv(patches))):  all operands (N, *, HW) lane-dense."""
    N, KCp, HW = patches.shape
    O = w_mat.shape[0]
    ot = _pick_o_tile(O)
    return pl.pallas_call(
        _conv_in_combine_kernel,
        out_shape=jax.ShapeDtypeStruct((N, O, HW), jnp.float32),
        grid=(N, O // ot),
        in_specs=[
            pl.BlockSpec((1, KCp, HW), lambda n, o: (n, 0, 0)),
            pl.BlockSpec((ot, KCp), lambda n, o: (o, 0)),
            pl.BlockSpec((1, ot, HW), lambda n, o: (n, o, 0)),
            pl.BlockSpec((1, ot, HW), lambda n, o: (n, o, 0)),
        ],
        out_specs=pl.BlockSpec((1, ot, HW), lambda n, o: (n, o, 0)),
        compiler_params=_compiler_params(),
    )(patches, w_mat, x_flat, pre)


# ----------------------------------------------------------------------------
# Full ResnetBlock forward
# ----------------------------------------------------------------------------
def resnet_block_forward(x, params):
    """ResnetBlock.forward, NCHW in / NCHW out."""
    N, C, H, W = x.shape
    HW = H * W
    KCp = _round_up(9 * C, 8)   # contraction axis padded to the sublane granule

    pad_zero = lambda a: jnp.pad(a, ((0, 0), (0, 0), (1, 1), (1, 1)))
    pad_refl = lambda a: jnp.pad(a, ((0, 0), (0, 0), (1, 1), (1, 1)),
                                 mode="reflect")

    # Fused sobel/prewitt branches: zero-pad -> conv -> IN -> ReLU -> average.
    w_edge = jnp.stack([_weight_to_mat(params[k], KCp)
                        for k in ("w_px", "w_py", "w_p45", "w_p135")], axis=0)
    patches_z = _im2col(pad_zero(x), H, W, KCp)
    pre = fused_edge_branches(patches_z, w_edge)                   # (N, C, HW)

    # conv_block: ReflPad -> Conv -> IN -> ReLU -> ReflPad -> Conv -> IN,
    # with the final `x + cb + pre` fused into the second conv kernel.
    w_cb1 = _weight_to_mat(params["w_cb1"], KCp)
    w_cb2 = _weight_to_mat(params["w_cb2"], KCp)

    h1 = conv3x3_instancenorm(_im2col(pad_refl(x), H, W, KCp), w_cb1,
                              apply_relu=True)                     # (N, C, HW)
    patches_h1 = _im2col(pad_refl(h1.reshape(N, C, H, W)), H, W, KCp)
    out = conv3x3_in_combine(patches_h1, w_cb2,
                             x.reshape(N, C, HW), pre)             # (N, C, HW)
    return out.reshape(N, C, H, W)


# ----------------------------------------------------------------------------
# Pure-JAX reference (correctness check only)
# ----------------------------------------------------------------------------
def _ref_conv(xpad, w):
    return lax.conv_general_dilated(
        xpad, w, (1, 1), "VALID",
        dimension_numbers=("NCHW", "OIHW", "NCHW"))


def _ref_inorm(y):
    m = jnp.mean(y, axis=(2, 3), keepdims=True)
    v = jnp.mean((y - m) ** 2, axis=(2, 3), keepdims=True)
    return (y - m) * lax.rsqrt(v + EPS)


def resnet_block_reference(x, params):
    pad_zero = lambda a: jnp.pad(a, ((0, 0), (0, 0), (1, 1), (1, 1)))
    pad_refl = lambda a: jnp.pad(a, ((0, 0), (0, 0), (1, 1), (1, 1)),
                                 mode="reflect")
    relu = lambda a: jnp.maximum(a, 0.0)

    xz = pad_zero(x)
    pre_x = relu(_ref_inorm(_ref_conv(xz, params["w_px"])))
    pre_y = relu(_ref_inorm(_ref_conv(xz, params["w_py"])))
    pre_45 = relu(_ref_inorm(_ref_conv(xz, params["w_p45"])))
    pre_135 = relu(_ref_inorm(_ref_conv(xz, params["w_p135"])))
    pre = 0.25 * pre_x + 0.25 * pre_y + 0.25 * pre_45 + 0.25 * pre_135

    h1 = relu(_ref_inorm(_ref_conv(pad_refl(x), params["w_cb1"])))
    cb = _ref_inorm(_ref_conv(pad_refl(h1), params["w_cb2"]))
    return x + cb + pre


# ----------------------------------------------------------------------------
# Parameter construction (deterministic, synthetic)
# ----------------------------------------------------------------------------
def make_params(dim, key):
    def repeat_kernel(k3x3):
        k = jnp.asarray(k3x3, dtype=jnp.float32)
        return jnp.tile(k[None, None, :, :], (dim, dim, 1, 1))

    k1, k2 = jax.random.split(key)
    return {
        "w_px": repeat_kernel([[1, 2, 1], [0, 0, 0], [-1, -2, -1]]),
        "w_py": repeat_kernel([[1, 0, -1], [2, 0, -2], [1, 0, -1]]),
        "w_p45": repeat_kernel([[0, -3, -10], [3, 0, -3], [10, 3, 0]]),
        "w_p135": repeat_kernel([[10, 3, 0], [3, 0, -3], [0, -3, -10]]),
        "w_cb1": 0.1 * jax.random.normal(k1, (dim, dim, 3, 3), jnp.float32),
        "w_cb2": 0.1 * jax.random.normal(k2, (dim, dim, 3, 3), jnp.float32),
    }


if __name__ == "__main__":
    key = jax.random.PRNGKey(0)
    kx, kp = jax.random.split(key)

    N, dim, H, W = 2, 4, 16, 16
    x = jax.random.normal(kx, (N, dim, H, W), jnp.float32)
    params = make_params(dim, kp)

    out = jax.block_until_ready(jax.jit(resnet_block_forward)(x, params))
    ref = jax.block_until_ready(resnet_block_reference(x, params))

    assert out.shape == (N, dim, H, W)
    max_err = float(jnp.max(jnp.abs(out - ref)))
    assert jnp.allclose(out, ref, atol=1e-2, rtol=1e-2), max_err

    print("KERNEL_OK")
</pallas_src>

<mosaic_0001>
module attributes {stable_mosaic.version = 11 : i64} {
  func.func @_edge_branch_kernel(%arg0: i32, %arg1: i32, %arg2: memref<1x40x256xf32, #tpu.memory_space<vmem>>, %arg3: memref<4x4x40xf32, #tpu.memory_space<vmem>>, %arg4: memref<1x4x256xf32, #tpu.memory_space<vmem>>) attributes {dimension_semantics = [#tpu.dimension_semantics<parallel>, #tpu.dimension_semantics<parallel>], iteration_bounds = array<i64: 2, 1>, scalar_prefetch = 0 : i64, scratch_operands = 0 : i64, tpu.core_type = #tpu.core_type<tc>, window_params = [{transform_indices = @transform_0, window_bounds = array<i64: 1, 40, 256>}, {transform_indices = @transform_1, window_bounds = array<i64: 4, 4, 40>}, {transform_indices = @transform_2, window_bounds = array<i64: 1, 4, 256>}]} {
    %c0 = arith.constant 0 : index
    %c0_0 = arith.constant 0 : index
    %c0_1 = arith.constant 0 : index
    %0 = vector.load %arg2[%c0, %c0_0, %c0_1] : memref<1x40x256xf32, #tpu.memory_space<vmem>>, vector<1x40x256xf32>
    %1 = vector.shape_cast %0 : vector<1x40x256xf32> to vector<40x256xf32>
    %cst = arith.constant 0.000000e+00 : f32
    %2 = vector.broadcast %cst : f32 to vector<4x256xf32>
    %c0_2 = arith.constant 0 : index
    %c0_3 = arith.constant 0 : index
    %c0_4 = arith.constant 0 : index
    %3 = vector.load %arg3[%c0_2, %c0_3, %c0_4] : memref<4x4x40xf32, #tpu.memory_space<vmem>>, vector<1x4x40xf32>
    %4 = vector.shape_cast %3 : vector<1x4x40xf32> to vector<4x40xf32>
    %cst_5 = arith.constant dense<0.000000e+00> : vector<4x256xf32>
    %5 = tpu.matmul %4, %1, %cst_5 {dimension_numbers = #tpu.dot_dimension_numbers<[1], [0], [0], [1], [0, 0, 1, 1], [], []>} : vector<4x40xf32>, vector<40x256xf32>, vector<4x256xf32> -> vector<4x256xf32>
    %cst_6 = arith.constant dense<0.000000e+00> : vector<4xf32>
    %6 = vector.multi_reduction <add>, %5, %cst_6 [1] : vector<4x256xf32> to vector<4xf32>
    %7 = vector.shape_cast %6 : vector<4xf32> to vector<4x1xf32>
    %cst_7 = arith.constant 2.560000e+02 : f32
    %8 = vector.broadcast %cst_7 : f32 to vector<4x1xf32>
    %9 = arith.divf %7, %8 : vector<4x1xf32>
    %10 = vector.broadcast %9 : vector<4x1xf32> to vector<4x256xf32>
    %11 = arith.subf %5, %10 : vector<4x256xf32>
    %12 = arith.mulf %11, %11 : vector<4x256xf32>
    %cst_8 = arith.constant dense<0.000000e+00> : vector<4xf32>
    %13 = vector.multi_reduction <add>, %12, %cst_8 [1] : vector<4x256xf32> to vector<4xf32>
    %14 = vector.shape_cast %13 : vector<4xf32> to vector<4x1xf32>
    %cst_9 = arith.constant 2.560000e+02 : f32
    %15 = vector.broadcast %cst_9 : f32 to vector<4x1xf32>
    %16 = arith.divf %14, %15 : vector<4x1xf32>
    %cst_10 = arith.constant 9.99999974E-6 : f32
    %17 = vector.broadcast %cst_10 : f32 to vector<4x1xf32>
    %18 = arith.addf %16, %17 : vector<4x1xf32>
    %19 = math.rsqrt %18 : vector<4x1xf32>
    %20 = vector.broadcast %19 : vector<4x1xf32> to vector<4x256xf32>
    %21 = arith.mulf %11, %20 : vector<4x256xf32>
    %cst_11 = arith.constant 0.000000e+00 : f32
    %22 = vector.broadcast %cst_11 : f32 to vector<4x256xf32>
    %23 = arith.maximumf %21, %22 : vector<4x256xf32>
    %24 = arith.addf %2, %23 : vector<4x256xf32>
    %c1 = arith.constant 1 : index
    %c0_12 = arith.constant 0 : index
    %c0_13 = arith.constant 0 : index
    %25 = vector.load %arg3[%c1, %c0_12, %c0_13] : memref<4x4x40xf32, #tpu.memory_space<vmem>>, vector<1x4x40xf32>
    %26 = vector.shape_cast %25 : vector<1x4x40xf32> to vector<4x40xf32>
    %cst_14 = arith.constant dense<0.000000e+00> : vector<4x256xf32>
    %27 = tpu.matmul %26, %1, %cst_14 {dimension_numbers = #tpu.dot_dimension_numbers<[1], [0], [0], [1], [0, 0, 1, 1], [], []>} : vector<4x40xf32>, vector<40x256xf32>, vector<4x256xf32> -> vector<4x256xf32>
    %cst_15 = arith.constant dense<0.000000e+00> : vector<4xf32>
    %28 = vector.multi_reduction <add>, %27, %cst_15 [1] : vector<4x256xf32> to vector<4xf32>
    %29 = vector.shape_cast %28 : vector<4xf32> to vector<4x1xf32>
    %cst_16 = arith.constant 2.560000e+02 : f32
    %30 = vector.broadcast %cst_16 : f32 to vector<4x1xf32>
    %31 = arith.divf %29, %30 : vector<4x1xf32>
    %32 = vector.broadcast %31 : vector<4x1xf32> to vector<4x256xf32>
    %33 = arith.subf %27, %32 : vector<4x256xf32>
    %34 = arith.mulf %33, %33 : vector<4x256xf32>
    %cst_17 = arith.constant dense<0.000000e+00> : vector<4xf32>
    %35 = vector.multi_reduction <add>, %34, %cst_17 [1] : vector<4x256xf32> to vector<4xf32>
    %36 = vector.shape_cast %35 : vector<4xf32> to vector<4x1xf32>
    %cst_18 = arith.constant 2.560000e+02 : f32
    %37 = vector.broadcast %cst_18 : f32 to vector<4x1xf32>
    %38 = arith.divf %36, %37 : vector<4x1xf32>
    %cst_19 = arith.constant 9.99999974E-6 : f32
    %39 = vector.broadcast %cst_19 : f32 to vector<4x1xf32>
    %40 = arith.addf %38, %39 : vector<4x1xf32>
    %41 = math.rsqrt %40 : vector<4x1xf32>
    %42 = vector.broadcast %41 : vector<4x1xf32> to vector<4x256xf32>
    %43 = arith.mulf %33, %42 : vector<4x256xf32>
    %cst_20 = arith.constant 0.000000e+00 : f32
    %44 = vector.broadcast %cst_20 : f32 to vector<4x256xf32>
    %45 = arith.maximumf %43, %44 : vector<4x256xf32>
    %46 = arith.addf %24, %45 : vector<4x256xf32>
    %c2 = arith.constant 2 : index
    %c0_21 = arith.constant 0 : index
    %c0_22 = arith.constant 0 : index
    %47 = vector.load %arg3[%c2, %c0_21, %c0_22] : memref<4x4x40xf32, #tpu.memory_space<vmem>>, vector<1x4x40xf32>
    %48 = vector.shape_cast %47 : vector<1x4x40xf32> to vector<4x40xf32>
    %cst_23 = arith.constant dense<0.000000e+00> : vector<4x256xf32>
    %49 = tpu.matmul %48, %1, %cst_23 {dimension_numbers = #tpu.dot_dimension_numbers<[1], [0], [0], [1], [0, 0, 1, 1], [], []>} : vector<4x40xf32>, vector<40x256xf32>, vector<4x256xf32> -> vector<4x256xf32>
    %cst_24 = arith.constant dense<0.000000e+00> : vector<4xf32>
    %50 = vector.multi_reduction <add>, %49, %cst_24 [1] : vector<4x256xf32> to vector<4xf32>
    %51 = vector.shape_cast %50 : vector<4xf32> to vector<4x1xf32>
    %cst_25 = arith.constant 2.560000e+02 : f32
    %52 = vector.broadcast %cst_25 : f32 to vector<4x1xf32>
    %53 = arith.divf %51, %52 : vector<4x1xf32>
    %54 = vector.broadcast %53 : vector<4x1xf32> to vector<4x256xf32>
    %55 = arith.subf %49, %54 : vector<4x256xf32>
    %56 = arith.mulf %55, %55 : vector<4x256xf32>
    %cst_26 = arith.constant dense<0.000000e+00> : vector<4xf32>
    %57 = vector.multi_reduction <add>, %56, %cst_26 [1] : vector<4x256xf32> to vector<4xf32>
    %58 = vector.shape_cast %57 : vector<4xf32> to vector<4x1xf32>
    %cst_27 = arith.constant 2.560000e+02 : f32
    %59 = vector.broadcast %cst_27 : f32 to vector<4x1xf32>
    %60 = arith.divf %58, %59 : vector<4x1xf32>
    %cst_28 = arith.constant 9.99999974E-6 : f32
    %61 = vector.broadcast %cst_28 : f32 to vector<4x1xf32>
    %62 = arith.addf %60, %61 : vector<4x1xf32>
    %63 = math.rsqrt %62 : vector<4x1xf32>
    %64 = vector.broadcast %63 : vector<4x1xf32> to vector<4x256xf32>
    %65 = arith.mulf %55, %64 : vector<4x256xf32>
    %cst_29 = arith.constant 0.000000e+00 : f32
    %66 = vector.broadcast %cst_29 : f32 to vector<4x256xf32>
    %67 = arith.maximumf %65, %66 : vector<4x256xf32>
    %68 = arith.addf %46, %67 : vector<4x256xf32>
    %c3 = arith.constant 3 : index
    %c0_30 = arith.constant 0 : index
    %c0_31 = arith.constant 0 : index
    %69 = vector.load %arg3[%c3, %c0_30, %c0_31] : memref<4x4x40xf32, #tpu.memory_space<vmem>>, vector<1x4x40xf32>
    %70 = vector.shape_cast %69 : vector<1x4x40xf32> to vector<4x40xf32>
    %cst_32 = arith.constant dense<0.000000e+00> : vector<4x256xf32>
    %71 = tpu.matmul %70, %1, %cst_32 {dimension_numbers = #tpu.dot_dimension_numbers<[1], [0], [0], [1], [0, 0, 1, 1], [], []>} : vector<4x40xf32>, vector<40x256xf32>, vector<4x256xf32> -> vector<4x256xf32>
    %cst_33 = arith.constant dense<0.000000e+00> : vector<4xf32>
    %72 = vector.multi_reduction <add>, %71, %cst_33 [1] : vector<4x256xf32> to vector<4xf32>
    %73 = vector.shape_cast %72 : vector<4xf32> to vector<4x1xf32>
    %cst_34 = arith.constant 2.560000e+02 : f32
    %74 = vector.broadcast %cst_34 : f32 to vector<4x1xf32>
    %75 = arith.divf %73, %74 : vector<4x1xf32>
    %76 = vector.broadcast %75 : vector<4x1xf32> to vector<4x256xf32>
    %77 = arith.subf %71, %76 : vector<4x256xf32>
    %78 = arith.mulf %77, %77 : vector<4x256xf32>
    %cst_35 = arith.constant dense<0.000000e+00> : vector<4xf32>
    %79 = vector.multi_reduction <add>, %78, %cst_35 [1] : vector<4x256xf32> to vector<4xf32>
    %80 = vector.shape_cast %79 : vector<4xf32> to vector<4x1xf32>
    %cst_36 = arith.constant 2.560000e+02 : f32
    %81 = vector.broadcast %cst_36 : f32 to vector<4x1xf32>
    %82 = arith.divf %80, %81 : vector<4x1xf32>
    %cst_37 = arith.constant 9.99999974E-6 : f32
    %83 = vector.broadcast %cst_37 : f32 to vector<4x1xf32>
    %84 = arith.addf %82, %83 : vector<4x1xf32>
    %85 = math.rsqrt %84 : vector<4x1xf32>
    %86 = vector.broadcast %85 : vector<4x1xf32> to vector<4x256xf32>
    %87 = arith.mulf %77, %86 : vector<4x256xf32>
    %cst_38 = arith.constant 0.000000e+00 : f32
    %88 = vector.broadcast %cst_38 : f32 to vector<4x256xf32>
    %89 = arith.maximumf %87, %88 : vector<4x256xf32>
    %90 = arith.addf %68, %89 : vector<4x256xf32>
    %cst_39 = arith.constant 2.500000e-01 : f32
    %91 = vector.broadcast %cst_39 : f32 to vector<4x256xf32>
    %92 = arith.mulf %90, %91 : vector<4x256xf32>
    %c0_40 = arith.constant 0 : index
    %c0_41 = arith.constant 0 : index
    %c0_42 = arith.constant 0 : index
    %93 = vector.load %arg4[%c0_40, %c0_41, %c0_42] : memref<1x4x256xf32, #tpu.memory_space<vmem>>, vector<1x4x256xf32>
    %94 = vector.shape_cast %93 : vector<1x4x256xf32> to vector<4x256xf32>
    %95 = vector.shape_cast %92 : vector<4x256xf32> to vector<1x4x256xf32>
    tpu.vector_store %arg4[%c0_40, %c0_41, %c0_42], %95 {strides = array<i32>} : memref<1x4x256xf32, #tpu.memory_space<vmem>>, vector<1x4x256xf32>,
    return
  }
  func.func @transform_0(%arg0: i32, %arg1: i32) -> (i32, i32, i32) {
    %c0_i32 = arith.constant 0 : i32
    %c0_i32_0 = arith.constant 0 : i32
    %c0_i32_1 = arith.constant 0 : i32
    return %arg0, %c0_i32, %c0_i32_0 : i32, i32, i32
  }
  func.func @transform_1(%arg0: i32, %arg1: i32) -> (i32, i32, i32) {
    %c0_i32 = arith.constant 0 : i32
    %c0_i32_0 = arith.constant 0 : i32
    %c0_i32_1 = arith.constant 0 : i32
    return %c0_i32, %arg1, %c0_i32_0 : i32, i32, i32
  }
  func.func @transform_2(%arg0: i32, %arg1: i32) -> (i32, i32, i32) {
    %c0_i32 = arith.constant 0 : i32
    %c0_i32_0 = arith.constant 0 : i32
    return %arg0, %arg1, %c0_i32 : i32, i32, i32
  }
}

module attributes {stable_mosaic.version = 11 : i64} {
  func.func @_conv_in_kernel(%arg0: i32, %arg1: i32, %arg2: memref<1x40x256xf32, #tpu.memory_space<vmem>>, %arg3: memref<4x40xf32, #tpu.memory_space<vmem>>, %arg4: memref<1x4x256xf32, #tpu.memory_space<vmem>>) attributes {dimension_semantics = [#tpu.dimension_semantics<parallel>, #tpu.dimension_semantics<parallel>], iteration_bounds = array<i64: 2, 1>, scalar_prefetch = 0 : i64, scratch_operands = 0 : i64, tpu.core_type = #tpu.core_type<tc>, window_params = [{transform_indices = @transform_0, window_bounds = array<i64: 1, 40, 256>}, {transform_indices = @transform_1, window_bounds = array<i64: 4, 40>}, {transform_indices = @transform_2, window_bounds = array<i64: 1, 4, 256>}]} {
    %c0 = arith.constant 0 : index
    %c0_0 = arith.constant 0 : index
    %0 = vector.load %arg3[%c0, %c0_0] : memref<4x40xf32, #tpu.memory_space<vmem>>, vector<4x40xf32>
    %c0_1 = arith.constant 0 : index
    %c0_2 = arith.constant 0 : index
    %c0_3 = arith.constant 0 : index
    %1 = vector.load %arg2[%c0_1, %c0_2, %c0_3] : memref<1x40x256xf32, #tpu.memory_space<vmem>>, vector<1x40x256xf32>
    %2 = vector.shape_cast %1 : vector<1x40x256xf32> to vector<40x256xf32>
    %cst = arith.constant dense<0.000000e+00> : vector<4x256xf32>
    %3 = tpu.matmul %0, %2, %cst {dimension_numbers = #tpu.dot_dimension_numbers<[1], [0], [0], [1], [0, 0, 1, 1], [], []>} : vector<4x40xf32>, vector<40x256xf32>, vector<4x256xf32> -> vector<4x256xf32>
    %cst_4 = arith.constant dense<0.000000e+00> : vector<4xf32>
    %4 = vector.multi_reduction <add>, %3, %cst_4 [1] : vector<4x256xf32> to vector<4xf32>
    %5 = vector.shape_cast %4 : vector<4xf32> to vector<4x1xf32>
    %cst_5 = arith.constant 2.560000e+02 : f32
    %6 = vector.broadcast %cst_5 : f32 to vector<4x1xf32>
    %7 = arith.divf %5, %6 : vector<4x1xf32>
    %8 = vector.broadcast %7 : vector<4x1xf32> to vector<4x256xf32>
    %9 = arith.subf %3, %8 : vector<4x256xf32>
    %10 = arith.mulf %9, %9 : vector<4x256xf32>
    %cst_6 = arith.constant dense<0.000000e+00> : vector<4xf32>
    %11 = vector.multi_reduction <add>, %10, %cst_6 [1] : vector<4x256xf32> to vector<4xf32>
    %12 = vector.shape_cast %11 : vector<4xf32> to vector<4x1xf32>
    %cst_7 = arith.constant 2.560000e+02 : f32
    %13 = vector.broadcast %cst_7 : f32 to vector<4x1xf32>
    %14 = arith.divf %12, %13 : vector<4x1xf32>
    %cst_8 = arith.constant 9.99999974E-6 : f32
    %15 = vector.broadcast %cst_8 : f32 to vector<4x1xf32>
    %16 = arith.addf %14, %15 : vector<4x1xf32>
    %17 = math.rsqrt %16 : vector<4x1xf32>
    %18 = vector.broadcast %17 : vector<4x1xf32> to vector<4x256xf32>
    %19 = arith.mulf %9, %18 : vector<4x256xf32>
    %cst_9 = arith.constant 0.000000e+00 : f32
    %20 = vector.broadcast %cst_9 : f32 to vector<4x256xf32>
    %21 = arith.maximumf %19, %20 : vector<4x256xf32>
    %c0_10 = arith.constant 0 : index
    %c0_11 = arith.constant 0 : index
    %c0_12 = arith.constant 0 : index
    %22 = vector.load %arg4[%c0_10, %c0_11, %c0_12] : memref<1x4x256xf32, #tpu.memory_space<vmem>>, vector<1x4x256xf32>
    %23 = vector.shape_cast %22 : vector<1x4x256xf32> to vector<4x256xf32>
    %24 = vector.shape_cast %21 : vector<4x256xf32> to vector<1x4x256xf32>
    tpu.vector_store %arg4[%c0_10, %c0_11, %c0_12], %24 {strides = array<i32>} : memref<1x4x256xf32, #tpu.memory_space<vmem>>, vector<1x4x256xf32>,
    return
  }
  func.func @transform_0(%arg0: i32, %arg1: i32) -> (i32, i32, i32) {
    %c0_i32 = arith.constant 0 : i32
    %c0_i32_0 = arith.constant 0 : i32
    %c0_i32_1 = arith.constant 0 : i32
    return %arg0, %c0_i32, %c0_i32_0 : i32, i32, i32
  }
  func.func @transform_1(%arg0: i32, %arg1: i32) -> (i32, i32) {
    %c0_i32 = arith.constant 0 : i32
    %c0_i32_0 = arith.constant 0 : i32
    return %arg1, %c0_i32 : i32, i32
  }
  func.func @transform_2(%arg0: i32, %arg1: i32) -> (i32, i32, i32) {
    %c0_i32 = arith.constant 0 : i32
    %c0_i32_0 = arith.constant 0 : i32
    return %arg0, %arg1, %c0_i32 : i32, i32, i32
  }
}

module attributes {stable_mosaic.version = 11 : i64} {
  func.func @_conv_in_combine_kernel(%arg0: i32, %arg1: i32, %arg2: memref<1x40x256xf32, #tpu.memory_space<vmem>>, %arg3: memref<4x40xf32, #tpu.memory_space<vmem>>, %arg4: memref<1x4x256xf32, #tpu.memory_space<vmem>>, %arg5: memref<1x4x256xf32, #tpu.memory_space<vmem>>, %arg6: memref<1x4x256xf32, #tpu.memory_space<vmem>>) attributes {dimension_semantics = [#tpu.dimension_semantics<parallel>, #tpu.dimension_semantics<parallel>], iteration_bounds = array<i64: 2, 1>, scalar_prefetch = 0 : i64, scratch_operands = 0 : i64, tpu.core_type = #tpu.core_type<tc>, window_params = [{transform_indices = @transform_0, window_bounds = array<i64: 1, 40, 256>}, {transform_indices = @transform_1, window_bounds = array<i64: 4, 40>}, {transform_indices = @transform_2, window_bounds = array<i64: 1, 4, 256>}, {transform_indices = @transform_3, window_bounds = array<i64: 1, 4, 256>}, {transform_indices = @transform_4, window_bounds = array<i64: 1, 4, 256>}]} {
    %c0 = arith.constant 0 : index
    %c0_0 = arith.constant 0 : index
    %0 = vector.load %arg3[%c0, %c0_0] : memref<4x40xf32, #tpu.memory_space<vmem>>, vector<4x40xf32>
    %c0_1 = arith.constant 0 : index
    %c0_2 = arith.constant 0 : index
    %c0_3 = arith.constant 0 : index
    %1 = vector.load %arg2[%c0_1, %c0_2, %c0_3] : memref<1x40x256xf32, #tpu.memory_space<vmem>>, vector<1x40x256xf32>
    %2 = vector.shape_cast %1 : vector<1x40x256xf32> to vector<40x256xf32>
    %cst = arith.constant dense<0.000000e+00> : vector<4x256xf32>
    %3 = tpu.matmul %0, %2, %cst {dimension_numbers = #tpu.dot_dimension_numbers<[1], [0], [0], [1], [0, 0, 1, 1], [], []>} : vector<4x40xf32>, vector<40x256xf32>, vector<4x256xf32> -> vector<4x256xf32>
    %cst_4 = arith.constant dense<0.000000e+00> : vector<4xf32>
    %4 = vector.multi_reduction <add>, %3, %cst_4 [1] : vector<4x256xf32> to vector<4xf32>
    %5 = vector.shape_cast %4 : vector<4xf32> to vector<4x1xf32>
    %cst_5 = arith.constant 2.560000e+02 : f32
    %6 = vector.broadcast %cst_5 : f32 to vector<4x1xf32>
    %7 = arith.divf %5, %6 : vector<4x1xf32>
    %8 = vector.broadcast %7 : vector<4x1xf32> to vector<4x256xf32>
    %9 = arith.subf %3, %8 : vector<4x256xf32>
    %10 = arith.mulf %9, %9 : vector<4x256xf32>
    %cst_6 = arith.constant dense<0.000000e+00> : vector<4xf32>
    %11 = vector.multi_reduction <add>, %10, %cst_6 [1] : vector<4x256xf32> to vector<4xf32>
    %12 = vector.shape_cast %11 : vector<4xf32> to vector<4x1xf32>
    %cst_7 = arith.constant 2.560000e+02 : f32
    %13 = vector.broadcast %cst_7 : f32 to vector<4x1xf32>
    %14 = arith.divf %12, %13 : vector<4x1xf32>
    %cst_8 = arith.constant 9.99999974E-6 : f32
    %15 = vector.broadcast %cst_8 : f32 to vector<4x1xf32>
    %16 = arith.addf %14, %15 : vector<4x1xf32>
    %17 = math.rsqrt %16 : vector<4x1xf32>
    %18 = vector.broadcast %17 : vector<4x1xf32> to vector<4x256xf32>
    %19 = arith.mulf %9, %18 : vector<4x256xf32>
    %c0_9 = arith.constant 0 : index
    %c0_10 = arith.constant 0 : index
    %c0_11 = arith.constant 0 : index
    %20 = vector.load %arg4[%c0_9, %c0_10, %c0_11] : memref<1x4x256xf32, #tpu.memory_space<vmem>>, vector<1x4x256xf32>
    %21 = vector.shape_cast %20 : vector<1x4x256xf32> to vector<4x256xf32>
    %c0_12 = arith.constant 0 : index
    %c0_13 = arith.constant 0 : index
    %c0_14 = arith.constant 0 : index
    %22 = vector.load %arg5[%c0_12, %c0_13, %c0_14] : memref<1x4x256xf32, #tpu.memory_space<vmem>>, vector<1x4x256xf32>
    %23 = vector.shape_cast %22 : vector<1x4x256xf32> to vector<4x256xf32>
    %24 = arith.addf %21, %23 : vector<4x256xf32>
    %25 = arith.addf %24, %19 : vector<4x256xf32>
    %c0_15 = arith.constant 0 : index
    %c0_16 = arith.constant 0 : index
    %c0_17 = arith.constant 0 : index
    %26 = vector.load %arg6[%c0_15, %c0_16, %c0_17] : memref<1x4x256xf32, #tpu.memory_space<vmem>>, vector<1x4x256xf32>
    %27 = vector.shape_cast %26 : vector<1x4x256xf32> to vector<4x256xf32>
    %28 = vector.shape_cast %25 : vector<4x256xf32> to vector<1x4x256xf32>
    tpu.vector_store %arg6[%c0_15, %c0_16, %c0_17], %28 {strides = array<i32>} : memref<1x4x256xf32, #tpu.memory_space<vmem>>, vector<1x4x256xf32>,
    return
  }
  func.func @transform_0(%arg0: i32, %arg1: i32) -> (i32, i32, i32) {
    %c0_i32 = arith.constant 0 : i32
    %c0_i32_0 = arith.constant 0 : i32
    %c0_i32_1 = arith.constant 0 : i32
    return %arg0, %c0_i32, %c0_i32_0 : i32, i32, i32
  }
  func.func @transform_1(%arg0: i32, %arg1: i32) -> (i32, i32) {
    %c0_i32 = arith.constant 0 : i32
    %c0_i32_0 = arith.constant 0 : i32
    return %arg1, %c0_i32 : i32, i32
  }
  func.func @transform_2(%arg0: i32, %arg1: i32) -> (i32, i32, i32) {
    %c0_i32 = arith.constant 0 : i32
    %c0_i32_0 = arith.constant 0 : i32
    return %arg0, %arg1, %c0_i32 : i32, i32, i32
  }
  func.func @transform_3(%arg0: i32, %arg1: i32) -> (i32, i32, i32) {
    %c0_i32 = arith.constant 0 : i32
    %c0_i32_0 = arith.constant 0 : i32
    return %arg0, %arg1, %c0_i32 : i32, i32, i32
  }
  func.func @transform_4(%arg0: i32, %arg1: i32) -> (i32, i32, i32) {
    %c0_i32 = arith.constant 0 : i32
    %c0_i32_0 = arith.constant 0 : i32
    return %arg0, %arg1, %c0_i32 : i32, i32, i32
  }
}

</mosaic_0001>

<llo_original>
// kernel: resnet_block_forward.3
$region0: #{resnet_block_forward.3}
  #allocation0 [shape = 'u32[]', space=smem, size = 0x4, offset = 0x4, fixed_abs, tag = 'smem constant byte address 0x4 - core index']
  #allocation1 [shape = 'u32[72,128]{1,0:T(1,128)}', space=vmem, size = 0x9000, scoped, tag = 'internal scratch']
  %s0 = inlined_call_operand.vmem [shape: f32[2,40,256], index: 0, kind: input, shape index: {}]
  %s1 = inlined_call_operand.vmem [shape: f32[4,4,40], index: 1, kind: input, shape index: {}]
  %s2 = inlined_call_operand.vmem [shape: f32[2,4,256], index: 2, kind: output, shape index: {}]
  %s3 = sld [smem:[#allocation0]]
  $region41: #{resnet_block_forward.3} parent=0
    _
  %s5 = ssub.s32 1, %s3
  %s6 = scalar_select 0, %s5, %s3
  loop: start=0, step=1, limit=4
  $region2: #{resnet_block_forward.3} parent=0 // loop_pre_header
    _
  $region3: #{resnet_block_forward.3} parent=0 // loop_header
    %s8 = sphi 0, %s12
    %p9 = scmp.ge.s32.totalorder %s8, 4
    %s15 = sphi 0, %s27
    %s16 = sphi 0, %s23
    %s17 = sphi 0, %s15
    %s18 = sphi 0, %s16
    %s19 = sphi 0, %s17
    %s20 = sphi 0, %s18
    %s30 = sphi 0, %s32
    %s33 = sphi 0, %s30
    %s34 = sphi 0, %s33
    %s50 = sphi 0, %s34
    %s56 = sphi 0, %s58
    %s59 = sphi 0, %s56
    %s60 = sphi 0, %s59
    %s76 = sphi 0, %s60
    %s84 = sphi 0, %s86
    %s87 = sphi 0, %s84
    %s88 = sphi 0, %s87
    %s104 = sphi 0, %s88
  $region4: #{resnet_block_forward.3} parent=0 // loop_header_branch
    %11 = sbr.rel (%p9) target = $region8
  $region5: #{resnet_block_forward.3} parent=0 // loop_body
    %s13 = ssub.s32 %s8, 1
    %s14 = ssub.s32 %s8, 2
    %s21 = sadd.s32 1, %s16
    %p22 = scmp.ge.s32.totalorder %s21, 1
    %s23 = scalar_select %p22, 0, %s21
    %s24 = sadd.s32 1, %s15
    %s25 = scalar_select %p22, %s24, %s15
    %p26 = scmp.ge.s32.totalorder %s25, 2
    %s27 = scalar_select %p26, 0, %s25
    %s28 = ssub.s32 %s15, %s27
    %p29 = scmp.eq.s32.totalorder %s28, 0
    %s31 = sadd.s32 %s30, 1
    %s32 = scalar_select %p29, %s30, %s31
    %p35 = pneg %p29
    %p36 = scmp.eq.s32.totalorder %s8, 1
    %p37 = por %p35, %p36
    %p38 = scmp.ne.s32.totalorder %s30, %s33
    %p39 = scmp.eq.s32.totalorder %s8, 0
    %p40 = por %p38, %p39
    %p41 = scmp.ne.s32.totalorder %s30, %s33
    %p42 = scmp.eq.s32.totalorder %s13, 1
    %p43 = por %p41, %p42
    %p44 = scmp.ne.s32.totalorder %s33, %s34
    %p45 = scmp.eq.s32.totalorder %s13, 0
    %p46 = por %p44, %p45
    %p47 = scmp.ne.s32.totalorder %s33, %s34
    %p48 = scmp.eq.s32.totalorder %s14, 1
    %p49 = por %p47, %p48
    %p51 = scmp.ne.s32.totalorder %s34, %s50
    %p52 = scmp.eq.s32.totalorder %s14, 0
    %p53 = por %p51, %p52
    %s54 = ssub.s32 %s16, %s23
    %p55 = scmp.eq.s32.totalorder %s54, 0
    %s57 = sadd.s32 %s56, 1
    %s58 = scalar_select %p55, %s56, %s57
    %p61 = pneg %p55
    %p62 = scmp.eq.s32.totalorder %s8, 1
    %p63 = por %p61, %p62
    %p64 = scmp.ne.s32.totalorder %s56, %s59
    %p65 = scmp.eq.s32.totalorder %s8, 0
    %p66 = por %p64, %p65
    %p67 = scmp.ne.s32.totalorder %s56, %s59
    %p68 = scmp.eq.s32.totalorder %s13, 1
    %p69 = por %p67, %p68
    %p70 = scmp.ne.s32.totalorder %s59, %s60
    %p71 = scmp.eq.s32.totalorder %s13, 0
    %p72 = por %p70, %p71
    %p73 = scmp.ne.s32.totalorder %s59, %s60
    %p74 = scmp.eq.s32.totalorder %s14, 1
    %p75 = por %p73, %p74
    %p77 = scmp.ne.s32.totalorder %s60, %s76
    %p78 = scmp.eq.s32.totalorder %s14, 0
    %p79 = por %p77, %p78
    %s80 = ssub.s32 %s15, %s27
    %s81 = ssub.s32 %s16, %s23
    %s82 = sor.u32 %s80, %s81
    %p83 = scmp.eq.s32.totalorder %s82, 0
    %s85 = sadd.s32 %s84, 1
    %s86 = scalar_select %p83, %s84, %s85
    %p89 = pneg %p83
    %p90 = scmp.eq.s32.totalorder %s8, 1
    %p91 = por %p89, %p90
    %p92 = scmp.ne.s32.totalorder %s84, %s87
    %p93 = scmp.eq.s32.totalorder %s8, 0
    %p94 = por %p92, %p93
    %p95 = scmp.ne.s32.totalorder %s84, %s87
    %p96 = scmp.eq.s32.totalorder %s13, 1
    %p97 = por %p95, %p96
    %p98 = scmp.ne.s32.totalorder %s87, %s88
    %p99 = scmp.eq.s32.totalorder %s13, 0
    %p100 = por %p98, %p99
    %p101 = scmp.ne.s32.totalorder %s87, %s88
    %p102 = scmp.eq.s32.totalorder %s14, 1
    %p103 = por %p101, %p102
    %p105 = scmp.ne.s32.totalorder %s88, %s104
    %p106 = scmp.eq.s32.totalorder %s14, 0
    %p107 = por %p105, %p106
    %p108 = scmp.le.s32.totalorder 1, %s8
    %p109 = scmp.lt.s32.totalorder %s8, 3
    %p110 = pnand %p108, %p109
    %p111 = pneg %p110
    // Predicated region
    $region9: #{resnet_block_forward.3} parent=5 // pred_check
      _
    $region10: #{resnet_block_forward.3} parent=5 // pred_check_branch
      %113 = sbr.rel (%p110) target = $region12
    $region11: #{resnet_block_forward.3} parent=5 // pred_region
      %s114 = ssub.s32 %s8, 1
      // Predicated region
      $region13: #{resnet_block_forward.3} parent=11 // pred_check
        %p115 = pneg %p72
      $region14: #{resnet_block_forward.3} parent=11 // pred_check_branch
        %117 = sbr.rel (%p115) target = $region16
      $region15: #{resnet_block_forward.3} parent=11 // pred_region
        %p118 = scmp.lt.s32.totalorder %s18, 0
        %s119 = scalar_select %p118, %s18, 0
        %s120 = smul.addr %s119, 4
        %s121 = scalar_lea.vmem %s1, %s120
      $region16: #{resnet_block_forward.3} parent=11 // pred_fallthru
        _
    $region12: #{resnet_block_forward.3} parent=5 // pred_fallthru
      _
    %p122 = scmp.lt.s32.totalorder %s8, 2
    // Predicated region
    $region17: #{resnet_block_forward.3} parent=5 // pred_check
      %p123 = pneg %p122
    $region18: #{resnet_block_forward.3} parent=5 // pred_check_branch
      %125 = sbr.rel (%p123) target = $region20
    $region19: #{resnet_block_forward.3} parent=5 // pred_region
      // Predicated region
      $region21: #{resnet_block_forward.3} parent=19 // pred_check
        %p126 = pneg %p40
      $region22: #{resnet_block_forward.3} parent=19 // pred_check_branch
        %128 = sbr.rel (%p126) target = $region24
      $region23: #{resnet_block_forward.3} parent=19 // pred_region
        %p129 = scmp.lt.s32.totalorder %s15, 1
        %s130 = scalar_select %p129, %s15, 1
        %s131 = smul.addr %s130, 10
        %s132 = smul.addr %s131, 8
        %s133 = scalar_lea.vmem %s0, %s132
      $region24: #{resnet_block_forward.3} parent=19 // pred_fallthru
        _
    $region20: #{resnet_block_forward.3} parent=5 // pred_fallthru
      _
    %p134 = scmp.le.s32.totalorder 1, %s8
    %p135 = scmp.lt.s32.totalorder %s8, 3
    %p136 = pnand %p134, %p135
    %p137 = pneg %p136
    // Predicated region
    $region25: #{resnet_block_forward.3} parent=5 // pred_check
      _
    $region26: #{resnet_block_forward.3} parent=5 // pred_check_branch
      %139 = sbr.rel (%p136) target = $region28
    $region27: #{resnet_block_forward.3} parent=5 // pred_region
      %s140 = ssub.s32 %s8, 1
      %p141 = scmp.lt.s32.totalorder %s17, 1
      %s142 = scalar_select %p141, %s17, 1
      %s143 = smul.addr %s142, 10
      %s144 = smul.addr %s143, 8
      %s145 = scalar_lea.vmem %s0, %s144
      %p146 = pneg %p46
      %p147 = pneg %p43
      %p148 = scmp.lt.s32.totalorder %s18, 0
      %s149 = scalar_select %p148, %s18, 0
      %s150 = smul.addr %s149, 4
      %s151 = scalar_lea.vmem %s1, %s150
      %p152 = pneg %p72
      %p153 = pneg %p69
      %p154 = pneg %p100
      %p155 = pneg %p97
      %p156 = scmp.lt.s32.totalorder %s17, 1
      %s157 = scalar_select %p156, %s17, 1
      %p158 = scmp.lt.s32.totalorder %s18, 0
      %s159 = scalar_select %p158, %s18, 0
      %s160 = smul.addr %s159, 2
      %s161 = smul.addr %s157, 2
      %s162 = sadd.s32 %s160, %s161
      %s163 = smul.addr %s162, 4
      %s164 = scalar_lea.vmem %s2, %s163
      %p165 = scmp.lt.s32.totalorder %s17, 1
      %s166 = scalar_select %p165, %s17, 1
      %s167 = smul.addr %s166, 10
      %s168 = smul.addr %s167, 8
      %s169 = scalar_lea.vmem %s0, %s168
      %p170 = scmp.lt.s32.totalorder %s18, 0
      %s171 = scalar_select %p170, %s18, 0
      %s172 = smul.addr %s171, 4
      %s173 = scalar_lea.vmem %s1, %s172
      %p174 = scmp.lt.s32.totalorder %s17, 1
      %s175 = scalar_select %p174, %s17, 1
      %p176 = scmp.lt.s32.totalorder %s18, 0
      %s177 = scalar_select %p176, %s18, 0
      %s178 = smul.addr %s177, 2
      %s179 = smul.addr %s175, 2
      %s180 = sadd.s32 %s178, %s179
      %s181 = smul.addr %s180, 4
      %s182 = scalar_lea.vmem %s2, %s181
      %v183 = vld [vmem:[%s169] sm:$0xff]
      %v184 = vld [vmem:[%s169 + $0x8] sm:$0xff]
      %v185 = vld [vmem:[%s169 + $0x10] sm:$0xff]
      %v186 = vld [vmem:[%s169 + $0x18] sm:$0xff]
      %v187 = vld [vmem:[%s169 + $0x20] sm:$0xff]
      %v188 = vld [vmem:[%s169 + $0x28] sm:$0xff]
      %v189 = vld [vmem:[%s169 + $0x30] sm:$0xff]
      %v190 = vld [vmem:[%s169 + $0x38] sm:$0xff]
      %v191 = vld [vmem:[%s169 + $0x40] sm:$0xff]
      %v192 = vld [vmem:[%s169 + $0x48] sm:$0xff]
      %v193 = vld [vmem:[%s173] sm:$0xf]
      %vm194 = vcmask 326656
      %v196 = vsel %vm194, %v193, 0
      %198 = vmatpush.msra.mxu0 0.0
      %199 = vmatpush.msra.mxu0 0.0
      %200 = vmatpush.msra.mxu0 0.0
      %201 = vmatpush.msra.mxu0 0.0
      %202 = vmatpush.msra.mxu0 0.0
      %203 = vmatpush.msra.mxu0 0.0
      %204 = vmatpush.msra.mxu0 0.0
      %205 = vmatpush.msra.mxu0 0.0
      %206 = vmatpush.msra.mxu0 0.0
      %207 = vmatpush.msra.mxu0 0.0
      %208 = vmatpush.msra.mxu0 0.0
      %209 = vmatpush.msra.mxu0 %v191
      %210 = vmatpush.msra.mxu0 %v189
      %211 = vmatpush.msra.mxu0 %v187
      %212 = vmatpush.msra.mxu0 %v185
      %213 = vmatpush.msra.mxu0 %v183
      %214 = vmatmul.f32.gmra.mxu0 %v196
      %v215 = vpop.f32.mrf.mxu0
      %v216 = vadd.f32 0.0, %v215
      %217 = vdwg.mxu0
      %218 = vmatpush.msra.mxu0 0.0
      %219 = vmatpush.msra.mxu0 0.0
      %220 = vmatpush.msra.mxu0 0.0
      %221 = vmatpush.msra.mxu0 0.0
      %222 = vmatpush.msra.mxu0 0.0
      %223 = vmatpush.msra.mxu0 0.0
      %224 = vmatpush.msra.mxu0 0.0
      %225 = vmatpush.msra.mxu0 0.0
      %226 = vmatpush.msra.mxu0 0.0
      %227 = vmatpush.msra.mxu0 0.0
      %228 = vmatpush.msra.mxu0 0.0
      %229 = vmatpush.msra.mxu0 %v192
      %230 = vmatpush.msra.mxu0 %v190
      %231 = vmatpush.msra.mxu0 %v188
      %232 = vmatpush.msra.mxu0 %v186
      %233 = vmatpush.msra.mxu0 %v184
      %234 = vmatmul.f32.gmra.mxu0 %v196
      %v235 = vpop.f32.mrf.mxu0
      %v236 = vadd.f32 0.0, %v235
      %237 = vdwg.mxu0
      %vm238 = vcmask 1043456
      %v239 = vsel %vm238, %v216, 0.0
      %v240 = vsel %vm238, %v236, 0.0
      %v241 = vadd.f32 %v239, %v240
      %242 = vadd.xlane.f32.xlu0 %v241
      %v243 = vpop.xlane.xlu0 %242
      %v244 = vrcp.pop 256.0
      %v245 = vmul.f32 256.0, %v244
      %v246 = vsub.f32 1.0, %v245
      %v247 = vmul.f32 %v244, %v246
      %v248 = vadd.f32 %v244, %v247
      %vm249 = vweird.f32 %v244
      %v250 = vsel %vm249, %v244, %v248
      %v251 = vmul.f32 %v243, %v250
      %v252 = vsub.f32 %v216, %v251
      %v253 = vsub.f32 %v236, %v251
      %v254 = vmul.f32 %v252, %v252
      %v255 = vmul.f32 %v253, %v253
      %v256 = vsel %vm238, %v254, 0.0
      %v257 = vsel %vm238, %v255, 0.0
      %v258 = vadd.f32 %v256, %v257
      %259 = vadd.xlane.f32.xlu0 %v258
      %v260 = vpop.xlane.xlu0 %259
      %v261 = vmul.f32 %v260, %v250
      %v262 = vadd.f32 %v261, 1e-05
      %v263 = vrsqrt.pop %v262
      %v264 = vmul.f32 %v263, %v262
      %v265 = vmul.f32 %v264, %v263
      %v266 = vmul.f32 0.5, %v265
      %v267 = vsub.f32 1.5, %v266
      %v268 = vmul.f32 %v263, %v267
      %vm269 = vweird.f32 %v262
      %vm270 = vweird.f32 %v263
      %vm271 = vmor %vm269, %vm270
      %v272 = vsel %vm271, %v263, %v268
      %v273 = vmul.f32 %v252, %v272
      %v274 = vmul.f32 %v253, %v272
      %v275 = vmax.f32 %v273, 0.0
      %v276 = vmax.f32 %v274, 0.0
      %v277 = vadd.f32 %v275, 0.0
      %v278 = vadd.f32 %v276, 0.0
      %s279 = scalar_lea.vmem %s173, 4
      %v280 = vld [vmem:[%s279] sm:$0xf]
      %v282 = vsel %vm194, %v280, 0
      %284 = vmatpush.msra.mxu0 0.0
      %285 = vmatpush.msra.mxu0 0.0
      %286 = vmatpush.msra.mxu0 0.0
      %287 = vmatpush.msra.mxu0 0.0
      %288 = vmatpush.msra.mxu0 0.0
      %289 = vmatpush.msra.mxu0 0.0
      %290 = vmatpush.msra.mxu0 0.0
      %291 = vmatpush.msra.mxu0 0.0
      %292 = vmatpush.msra.mxu0 0.0
      %293 = vmatpush.msra.mxu0 0.0
      %294 = vmatpush.msra.mxu0 0.0
      %295 = vmatpush.msra.mxu0 %v191
      %296 = vmatpush.msra.mxu0 %v189
      %297 = vmatpush.msra.mxu0 %v187
      %298 = vmatpush.msra.mxu0 %v185
      %299 = vmatpush.msra.mxu0 %v183
      %300 = vmatmul.f32.gmra.mxu0 %v282
      %v301 = vpop.f32.mrf.mxu0
      %v302 = vadd.f32 0.0, %v301
      %303 = vdwg.mxu0
      %304 = vmatpush.msra.mxu0 0.0
      %305 = vmatpush.msra.mxu0 0.0
      %306 = vmatpush.msra.mxu0 0.0
      %307 = vmatpush.msra.mxu0 0.0
      %308 = vmatpush.msra.mxu0 0.0
      %309 = vmatpush.msra.mxu0 0.0
      %310 = vmatpush.msra.mxu0 0.0
      %311 = vmatpush.msra.mxu0 0.0
      %312 = vmatpush.msra.mxu0 0.0
      %313 = vmatpush.msra.mxu0 0.0
      %314 = vmatpush.msra.mxu0 0.0
      %315 = vmatpush.msra.mxu0 %v192
      %316 = vmatpush.msra.mxu0 %v190
      %317 = vmatpush.msra.mxu0 %v188
      %318 = vmatpush.msra.mxu0 %v186
      %319 = vmatpush.msra.mxu0 %v184
      %320 = vmatmul.f32.gmra.mxu0 %v282
      %v321 = vpop.f32.mrf.mxu0
      %v322 = vadd.f32 0.0, %v321
      %323 = vdwg.mxu0
      %v324 = vsel %vm238, %v302, 0.0
      %v325 = vsel %vm238, %v322, 0.0
      %v326 = vadd.f32 %v324, %v325
      %327 = vadd.xlane.f32.xlu0 %v326
      %v328 = vpop.xlane.xlu0 %327
      %v329 = vmul.f32 %v328, %v250
      %v330 = vsub.f32 %v302, %v329
      %v331 = vsub.f32 %v322, %v329
      %v332 = vmul.f32 %v330, %v330
      %v333 = vmul.f32 %v331, %v331
      %v334 = vsel %vm238, %v332, 0.0
      %v335 = vsel %vm238, %v333, 0.0
      %v336 = vadd.f32 %v334, %v335
      %337 = vadd.xlane.f32.xlu0 %v336
      %v338 = vpop.xlane.xlu0 %337
      %v339 = vmul.f32 %v338, %v250
      %v340 = vadd.f32 %v339, 1e-05
      %v341 = vrsqrt.pop %v340
      %v342 = vmul.f32 %v341, %v340
      %v343 = vmul.f32 %v342, %v341
      %v344 = vmul.f32 0.5, %v343
      %v345 = vsub.f32 1.5, %v344
      %v346 = vmul.f32 %v341, %v345
      %vm347 = vweird.f32 %v340
      %vm348 = vweird.f32 %v341
      %vm349 = vmor %vm347, %vm348
      %v350 = vsel %vm349, %v341, %v346
      %v351 = vmul.f32 %v330, %v350
      %v352 = vmul.f32 %v331, %v350
      %v353 = vmax.f32 %v351, 0.0
      %v354 = vmax.f32 %v352, 0.0
      %v355 = vadd.f32 %v277, %v353
      %v356 = vadd.f32 %v278, %v354
      %s357 = scalar_lea.vmem %s173, 8
      %v358 = vld [vmem:[%s357] sm:$0xf]
      %v360 = vsel %vm194, %v358, 0
      %362 = vmatpush.msra.mxu0 0.0
      %363 = vmatpush.msra.mxu0 0.0
      %364 = vmatpush.msra.mxu0 0.0
      %365 = vmatpush.msra.mxu0 0.0
      %366 = vmatpush.msra.mxu0 0.0
      %367 = vmatpush.msra.mxu0 0.0
      %368 = vmatpush.msra.mxu0 0.0
      %369 = vmatpush.msra.mxu0 0.0
      %370 = vmatpush.msra.mxu0 0.0
      %371 = vmatpush.msra.mxu0 0.0
      %372 = vmatpush.msra.mxu0 0.0
      %373 = vmatpush.msra.mxu0 %v191
      %374 = vmatpush.msra.mxu0 %v189
      %375 = vmatpush.msra.mxu0 %v187
      %376 = vmatpush.msra.mxu0 %v185
      %377 = vmatpush.msra.mxu0 %v183
      %378 = vmatmul.f32.gmra.mxu0 %v360
      %v379 = vpop.f32.mrf.mxu0
      %v380 = vadd.f32 0.0, %v379
      %381 = vdwg.mxu0
      %382 = vmatpush.msra.mxu0 0.0
      %383 = vmatpush.msra.mxu0 0.0
      %384 = vmatpush.msra.mxu0 0.0
      %385 = vmatpush.msra.mxu0 0.0
      %386 = vmatpush.msra.mxu0 0.0
      %387 = vmatpush.msra.mxu0 0.0
      %388 = vmatpush.msra.mxu0 0.0
      %389 = vmatpush.msra.mxu0 0.0
      %390 = vmatpush.msra.mxu0 0.0
      %391 = vmatpush.msra.mxu0 0.0
      %392 = vmatpush.msra.mxu0 0.0
      %393 = vmatpush.msra.mxu0 %v192
      %394 = vmatpush.msra.mxu0 %v190
      %395 = vmatpush.msra.mxu0 %v188
      %396 = vmatpush.msra.mxu0 %v186
      %397 = vmatpush.msra.mxu0 %v184
      %398 = vmatmul.f32.gmra.mxu0 %v360
      %v399 = vpop.f32.mrf.mxu0
      %v400 = vadd.f32 0.0, %v399
      %401 = vdwg.mxu0
      %v402 = vsel %vm238, %v380, 0.0
      %v403 = vsel %vm238, %v400, 0.0
      %v404 = vadd.f32 %v402, %v403
      %405 = vadd.xlane.f32.xlu0 %v404
      %v406 = vpop.xlane.xlu0 %405
      %v407 = vmul.f32 %v406, %v250
      %v408 = vsub.f32 %v380, %v407
      %v409 = vsub.f32 %v400, %v407
      %v410 = vmul.f32 %v408, %v408
      %v411 = vmul.f32 %v409, %v409
      %v412 = vsel %vm238, %v410, 0.0
      %v413 = vsel %vm238, %v411, 0.0
      %v414 = vadd.f32 %v412, %v413
      %415 = vadd.xlane.f32.xlu0 %v414
      %v416 = vpop.xlane.xlu0 %415
      %v417 = vmul.f32 %v416, %v250
      %v418 = vadd.f32 %v417, 1e-05
      %v419 = vrsqrt.pop %v418
      %v420 = vmul.f32 %v419, %v418
      %v421 = vmul.f32 %v420, %v419
      %v422 = vmul.f32 0.5, %v421
      %v423 = vsub.f32 1.5, %v422
      %v424 = vmul.f32 %v419, %v423
      %vm425 = vweird.f32 %v418
      %vm426 = vweird.f32 %v419
      %vm427 = vmor %vm425, %vm426
      %v428 = vsel %vm427, %v419, %v424
      %v429 = vmul.f32 %v408, %v428
      %v430 = vmul.f32 %v409, %v428
      %v431 = vmax.f32 %v429, 0.0
      %v432 = vmax.f32 %v430, 0.0
      %v433 = vadd.f32 %v355, %v431
      %v434 = vadd.f32 %v356, %v432
      %s435 = scalar_lea.vmem %s173, 12
      %v436 = vld [vmem:[%s435] sm:$0xf]
      %v438 = vsel %vm194, %v436, 0
      %440 = vmatpush.msra.mxu0 0.0
      %441 = vmatpush.msra.mxu0 0.0
      %442 = vmatpush.msra.mxu0 0.0
      %443 = vmatpush.msra.mxu0 0.0
      %444 = vmatpush.msra.mxu0 0.0
      %445 = vmatpush.msra.mxu0 0.0
      %446 = vmatpush.msra.mxu0 0.0
      %447 = vmatpush.msra.mxu0 0.0
      %448 = vmatpush.msra.mxu0 0.0
      %449 = vmatpush.msra.mxu0 0.0
      %450 = vmatpush.msra.mxu0 0.0
      %451 = vmatpush.msra.mxu0 %v191
      %452 = vmatpush.msra.mxu0 %v189
      %453 = vmatpush.msra.mxu0 %v187
      %454 = vmatpush.msra.mxu0 %v185
      %455 = vmatpush.msra.mxu0 %v183
      %456 = vmatmul.f32.gmra.mxu0 %v438
      %v457 = vpop.f32.mrf.mxu0
      %v458 = vadd.f32 0.0, %v457
      %459 = vdwg.mxu0
      %460 = vmatpush.msra.mxu0 0.0
      %461 = vmatpush.msra.mxu0 0.0
      %462 = vmatpush.msra.mxu0 0.0
      %463 = vmatpush.msra.mxu0 0.0
      %464 = vmatpush.msra.mxu0 0.0
      %465 = vmatpush.msra.mxu0 0.0
      %466 = vmatpush.msra.mxu0 0.0
      %467 = vmatpush.msra.mxu0 0.0
      %468 = vmatpush.msra.mxu0 0.0
      %469 = vmatpush.msra.mxu0 0.0
      %470 = vmatpush.msra.mxu0 0.0
      %471 = vmatpush.msra.mxu0 %v192
      %472 = vmatpush.msra.mxu0 %v190
      %473 = vmatpush.msra.mxu0 %v188
      %474 = vmatpush.msra.mxu0 %v186
      %475 = vmatpush.msra.mxu0 %v184
      %476 = vmatmul.f32.gmra.mxu0 %v438
      %v477 = vpop.f32.mrf.mxu0
      %v478 = vadd.f32 0.0, %v477
      %479 = vdwg.mxu0
      %v480 = vsel %vm238, %v458, 0.0
      %v481 = vsel %vm238, %v478, 0.0
      %v482 = vadd.f32 %v480, %v481
      %483 = vadd.xlane.f32.xlu0 %v482
      %v484 = vpop.xlane.xlu0 %483
      %v485 = vmul.f32 %v484, %v250
      %v486 = vsub.f32 %v458, %v485
      %v487 = vsub.f32 %v478, %v485
      %v488 = vmul.f32 %v486, %v486
      %v489 = vmul.f32 %v487, %v487
      %v490 = vsel %vm238, %v488, 0.0
      %v491 = vsel %vm238, %v489, 0.0
      %v492 = vadd.f32 %v490, %v491
      %493 = vadd.xlane.f32.xlu0 %v492
      %v494 = vpop.xlane.xlu0 %493
      %v495 = vmul.f32 %v494, %v250
      %v496 = vadd.f32 %v495, 1e-05
      %v497 = vrsqrt.pop %v496
      %v498 = vmul.f32 %v497, %v496
      %v499 = vmul.f32 %v498, %v497
      %v500 = vmul.f32 0.5, %v499
      %v501 = vsub.f32 1.5, %v500
      %v502 = vmul.f32 %v497, %v501
      %vm503 = vweird.f32 %v496
      %vm504 = vweird.f32 %v497
      %vm505 = vmor %vm503, %vm504
      %v506 = vsel %vm505, %v497, %v502
      %v507 = vmul.f32 %v486, %v506
      %v508 = vmul.f32 %v487, %v506
      %v509 = vmax.f32 %v507, 0.0
      %v510 = vmax.f32 %v508, 0.0
      %v511 = vadd.f32 %v433, %v509
      %v512 = vadd.f32 %v434, %v510
      %v513 = vmul.f32 %v511, 0.25
      %v514 = vmul.f32 %v512, 0.25
      %v517 = vrot.slane %v514, 4
      %v518 = vsel %vm238, %v513, %v517
      %520 = vst [vmem:[%s182] sm:$0xff] %v518
      %p521 = scmp.lt.s32.totalorder %s17, 1
      %s522 = scalar_select %p521, %s17, 1
      %p523 = scmp.lt.s32.totalorder %s18, 0
      %s524 = scalar_select %p523, %s18, 0
      %s525 = smul.addr %s524, 2
      %s526 = smul.addr %s522, 2
      %s527 = sadd.s32 %s525, %s526
      %s528 = smul.addr %s527, 4
      %s529 = scalar_lea.vmem %s2, %s528
      // Predicated region
      $region29: #{resnet_block_forward.3} parent=27 // pred_check
        %p530 = pneg %p97
      $region30: #{resnet_block_forward.3} parent=27 // pred_check_branch
        %532 = sbr.rel (%p530) target = $region32
      $region31: #{resnet_block_forward.3} parent=27 // pred_region
        _
      $region32: #{resnet_block_forward.3} parent=27 // pred_fallthru
        _
    $region28: #{resnet_block_forward.3} parent=5 // pred_fallthru
      _
    %p533 = scmp.le.s32.totalorder 2, %s8
    // Predicated region
    $region33: #{resnet_block_forward.3} parent=5 // pred_check
      %p534 = pneg %p533
    $region34: #{resnet_block_forward.3} parent=5 // pred_check_branch
      %536 = sbr.rel (%p534) target = $region36
    $region35: #{resnet_block_forward.3} parent=5 // pred_region
      %s537 = ssub.s32 %s8, 2
      // Predicated region
      $region37: #{resnet_block_forward.3} parent=35 // pred_check
        %p538 = pneg %p103
      $region38: #{resnet_block_forward.3} parent=35 // pred_check_branch
        %540 = sbr.rel (%p538) target = $region40
      $region39: #{resnet_block_forward.3} parent=35 // pred_region
        %p541 = scmp.lt.s32.totalorder %s19, 1
        %s542 = scalar_select %p541, %s19, 1
        %p543 = scmp.lt.s32.totalorder %s20, 0
        %s544 = scalar_select %p543, %s20, 0
        %s545 = smul.addr %s544, 2
        %s546 = smul.addr %s542, 2
        %s547 = sadd.s32 %s545, %s546
        %s548 = smul.addr %s547, 4
        %s549 = scalar_lea.vmem %s2, %s548
      $region40: #{resnet_block_forward.3} parent=35 // pred_fallthru
        _
    $region36: #{resnet_block_forward.3} parent=5 // pred_fallthru
      _
  $region6: #{resnet_block_forward.3} parent=0 // loop_footer
    %s12 = sadd.s32 1, %s8
  $region7: #{resnet_block_forward.3} parent=0 // loop_footer_branch
    %7 = sbr.rel target = $region3
  $region8: #{resnet_block_forward.3} parent=0 // loop_exit
    _

// kernel: resnet_block_forward.4
$region0: #{resnet_block_forward.4}
  #allocation0 [shape = 'u32[]', space=smem, size = 0x4, offset = 0x4, fixed_abs, tag = 'smem constant byte address 0x4 - core index']
  #allocation1 [shape = 'u32[72,128]{1,0:T(1,128)}', space=vmem, size = 0x9000, scoped, tag = 'internal scratch']
  %s0 = inlined_call_operand.vmem [shape: f32[2,40,256], index: 0, kind: input, shape index: {}]
  %s1 = inlined_call_operand.vmem [shape: f32[4,40], index: 1, kind: input, shape index: {}]
  %s2 = inlined_call_operand.vmem [shape: f32[2,4,256], index: 2, kind: output, shape index: {}]
  %s3 = sld [smem:[#allocation0]]
  $region41: #{resnet_block_forward.4} parent=0
    _
  %s5 = ssub.s32 1, %s3
  %s6 = scalar_select 0, %s5, %s3
  loop: start=0, step=1, limit=4
  $region2: #{resnet_block_forward.4} parent=0 // loop_pre_header
    _
  $region3: #{resnet_block_forward.4} parent=0 // loop_header
    %s8 = sphi 0, %s12
    %p9 = scmp.ge.s32.totalorder %s8, 4
    %s15 = sphi 0, %s27
    %s16 = sphi 0, %s23
    %s17 = sphi 0, %s15
    %s18 = sphi 0, %s16
    %s19 = sphi 0, %s17
    %s20 = sphi 0, %s18
    %s30 = sphi 0, %s32
    %s33 = sphi 0, %s30
    %s34 = sphi 0, %s33
    %s50 = sphi 0, %s34
    %s56 = sphi 0, %s58
    %s59 = sphi 0, %s56
    %s60 = sphi 0, %s59
    %s76 = sphi 0, %s60
    %s84 = sphi 0, %s86
    %s87 = sphi 0, %s84
    %s88 = sphi 0, %s87
    %s104 = sphi 0, %s88
  $region4: #{resnet_block_forward.4} parent=0 // loop_header_branch
    %11 = sbr.rel (%p9) target = $region8
  $region5: #{resnet_block_forward.4} parent=0 // loop_body
    %s13 = ssub.s32 %s8, 1
    %s14 = ssub.s32 %s8, 2
    %s21 = sadd.s32 1, %s16
    %p22 = scmp.ge.s32.totalorder %s21, 1
    %s23 = scalar_select %p22, 0, %s21
    %s24 = sadd.s32 1, %s15
    %s25 = scalar_select %p22, %s24, %s15
    %p26 = scmp.ge.s32.totalorder %s25, 2
    %s27 = scalar_select %p26, 0, %s25
    %s28 = ssub.s32 %s15, %s27
    %p29 = scmp.eq.s32.totalorder %s28, 0
    %s31 = sadd.s32 %s30, 1
    %s32 = scalar_select %p29, %s30, %s31
    %p35 = pneg %p29
    %p36 = scmp.eq.s32.totalorder %s8, 1
    %p37 = por %p35, %p36
    %p38 = scmp.ne.s32.totalorder %s30, %s33
    %p39 = scmp.eq.s32.totalorder %s8, 0
    %p40 = por %p38, %p39
    %p41 = scmp.ne.s32.totalorder %s30, %s33
    %p42 = scmp.eq.s32.totalorder %s13, 1
    %p43 = por %p41, %p42
    %p44 = scmp.ne.s32.totalorder %s33, %s34
    %p45 = scmp.eq.s32.totalorder %s13, 0
    %p46 = por %p44, %p45
    %p47 = scmp.ne.s32.totalorder %s33, %s34
    %p48 = scmp.eq.s32.totalorder %s14, 1
    %p49 = por %p47, %p48
    %p51 = scmp.ne.s32.totalorder %s34, %s50
    %p52 = scmp.eq.s32.totalorder %s14, 0
    %p53 = por %p51, %p52
    %s54 = ssub.s32 %s16, %s23
    %p55 = scmp.eq.s32.totalorder %s54, 0
    %s57 = sadd.s32 %s56, 1
    %s58 = scalar_select %p55, %s56, %s57
    %p61 = pneg %p55
    %p62 = scmp.eq.s32.totalorder %s8, 1
    %p63 = por %p61, %p62
    %p64 = scmp.ne.s32.totalorder %s56, %s59
    %p65 = scmp.eq.s32.totalorder %s8, 0
    %p66 = por %p64, %p65
    %p67 = scmp.ne.s32.totalorder %s56, %s59
    %p68 = scmp.eq.s32.totalorder %s13, 1
    %p69 = por %p67, %p68
    %p70 = scmp.ne.s32.totalorder %s59, %s60
    %p71 = scmp.eq.s32.totalorder %s13, 0
    %p72 = por %p70, %p71
    %p73 = scmp.ne.s32.totalorder %s59, %s60
    %p74 = scmp.eq.s32.totalorder %s14, 1
    %p75 = por %p73, %p74
    %p77 = scmp.ne.s32.totalorder %s60, %s76
    %p78 = scmp.eq.s32.totalorder %s14, 0
    %p79 = por %p77, %p78
    %s80 = ssub.s32 %s15, %s27
    %s81 = ssub.s32 %s16, %s23
    %s82 = sor.u32 %s80, %s81
    %p83 = scmp.eq.s32.totalorder %s82, 0
    %s85 = sadd.s32 %s84, 1
    %s86 = scalar_select %p83, %s84, %s85
    %p89 = pneg %p83
    %p90 = scmp.eq.s32.totalorder %s8, 1
    %p91 = por %p89, %p90
    %p92 = scmp.ne.s32.totalorder %s84, %s87
    %p93 = scmp.eq.s32.totalorder %s8, 0
    %p94 = por %p92, %p93
    %p95 = scmp.ne.s32.totalorder %s84, %s87
    %p96 = scmp.eq.s32.totalorder %s13, 1
    %p97 = por %p95, %p96
    %p98 = scmp.ne.s32.totalorder %s87, %s88
    %p99 = scmp.eq.s32.totalorder %s13, 0
    %p100 = por %p98, %p99
    %p101 = scmp.ne.s32.totalorder %s87, %s88
    %p102 = scmp.eq.s32.totalorder %s14, 1
    %p103 = por %p101, %p102
    %p105 = scmp.ne.s32.totalorder %s88, %s104
    %p106 = scmp.eq.s32.totalorder %s14, 0
    %p107 = por %p105, %p106
    %p108 = scmp.le.s32.totalorder 1, %s8
    %p109 = scmp.lt.s32.totalorder %s8, 3
    %p110 = pnand %p108, %p109
    %p111 = pneg %p110
    // Predicated region
    $region9: #{resnet_block_forward.4} parent=5 // pred_check
      _
    $region10: #{resnet_block_forward.4} parent=5 // pred_check_branch
      %113 = sbr.rel (%p110) target = $region12
    $region11: #{resnet_block_forward.4} parent=5 // pred_region
      %s114 = ssub.s32 %s8, 1
      // Predicated region
      $region13: #{resnet_block_forward.4} parent=11 // pred_check
        %p115 = pneg %p72
      $region14: #{resnet_block_forward.4} parent=11 // pred_check_branch
        %117 = sbr.rel (%p115) target = $region16
      $region15: #{resnet_block_forward.4} parent=11 // pred_region
        %p118 = scmp.lt.s32.totalorder %s18, 0
        %s119 = scalar_select %p118, %s18, 0
        %s120 = smul.addr %s119, 4
        %s121 = scalar_lea.vmem %s1, %s120
      $region16: #{resnet_block_forward.4} parent=11 // pred_fallthru
        _
    $region12: #{resnet_block_forward.4} parent=5 // pred_fallthru
      _
    %p122 = scmp.lt.s32.totalorder %s8, 2
    // Predicated region
    $region17: #{resnet_block_forward.4} parent=5 // pred_check
      %p123 = pneg %p122
    $region18: #{resnet_block_forward.4} parent=5 // pred_check_branch
      %125 = sbr.rel (%p123) target = $region20
    $region19: #{resnet_block_forward.4} parent=5 // pred_region
      // Predicated region
      $region21: #{resnet_block_forward.4} parent=19 // pred_check
        %p126 = pneg %p40
      $region22: #{resnet_block_forward.4} parent=19 // pred_check_branch
        %128 = sbr.rel (%p126) target = $region24
      $region23: #{resnet_block_forward.4} parent=19 // pred_region
        %p129 = scmp.lt.s32.totalorder %s15, 1
        %s130 = scalar_select %p129, %s15, 1
        %s131 = smul.addr %s130, 10
        %s132 = smul.addr %s131, 8
        %s133 = scalar_lea.vmem %s0, %s132
      $region24: #{resnet_block_forward.4} parent=19 // pred_fallthru
        _
    $region20: #{resnet_block_forward.4} parent=5 // pred_fallthru
      _
    %p134 = scmp.le.s32.totalorder 1, %s8
    %p135 = scmp.lt.s32.totalorder %s8, 3
    %p136 = pnand %p134, %p135
    %p137 = pneg %p136
    // Predicated region
    $region25: #{resnet_block_forward.4} parent=5 // pred_check
      _
    $region26: #{resnet_block_forward.4} parent=5 // pred_check_branch
      %139 = sbr.rel (%p136) target = $region28
    $region27: #{resnet_block_forward.4} parent=5 // pred_region
      %s140 = ssub.s32 %s8, 1
      %p141 = scmp.lt.s32.totalorder %s17, 1
      %s142 = scalar_select %p141, %s17, 1
      %s143 = smul.addr %s142, 10
      %s144 = smul.addr %s143, 8
      %s145 = scalar_lea.vmem %s0, %s144
      %p146 = pneg %p46
      %p147 = pneg %p43
      %p148 = scmp.lt.s32.totalorder %s18, 0
      %s149 = scalar_select %p148, %s18, 0
      %s150 = smul.addr %s149, 4
      %s151 = scalar_lea.vmem %s1, %s150
      %p152 = pneg %p72
      %p153 = pneg %p69
      %p154 = pneg %p100
      %p155 = pneg %p97
      %p156 = scmp.lt.s32.totalorder %s17, 1
      %s157 = scalar_select %p156, %s17, 1
      %p158 = scmp.lt.s32.totalorder %s18, 0
      %s159 = scalar_select %p158, %s18, 0
      %s160 = smul.addr %s159, 2
      %s161 = smul.addr %s157, 2
      %s162 = sadd.s32 %s160, %s161
      %s163 = smul.addr %s162, 4
      %s164 = scalar_lea.vmem %s2, %s163
      %p165 = scmp.lt.s32.totalorder %s17, 1
      %s166 = scalar_select %p165, %s17, 1
      %s167 = smul.addr %s166, 10
      %s168 = smul.addr %s167, 8
      %s169 = scalar_lea.vmem %s0, %s168
      %p170 = scmp.lt.s32.totalorder %s18, 0
      %s171 = scalar_select %p170, %s18, 0
      %s172 = smul.addr %s171, 4
      %s173 = scalar_lea.vmem %s1, %s172
      %p174 = scmp.lt.s32.totalorder %s17, 1
      %s175 = scalar_select %p174, %s17, 1
      %p176 = scmp.lt.s32.totalorder %s18, 0
      %s177 = scalar_select %p176, %s18, 0
      %s178 = smul.addr %s177, 2
      %s179 = smul.addr %s175, 2
      %s180 = sadd.s32 %s178, %s179
      %s181 = smul.addr %s180, 4
      %s182 = scalar_lea.vmem %s2, %s181
      %v183 = vld [vmem:[%s173] sm:$0xf]
      %v184 = vld [vmem:[%s169] sm:$0xff]
      %v185 = vld [vmem:[%s169 + $0x8] sm:$0xff]
      %v186 = vld [vmem:[%s169 + $0x10] sm:$0xff]
      %v187 = vld [vmem:[%s169 + $0x18] sm:$0xff]
      %v188 = vld [vmem:[%s169 + $0x20] sm:$0xff]
      %v189 = vld [vmem:[%s169 + $0x28] sm:$0xff]
      %v190 = vld [vmem:[%s169 + $0x30] sm:$0xff]
      %v191 = vld [vmem:[%s169 + $0x38] sm:$0xff]
      %v192 = vld [vmem:[%s169 + $0x40] sm:$0xff]
      %v193 = vld [vmem:[%s169 + $0x48] sm:$0xff]
      %vm194 = vcmask 326656
      %v196 = vsel %vm194, %v183, 0
      %198 = vmatpush.msra.mxu0 0.0
      %199 = vmatpush.msra.mxu0 0.0
      %200 = vmatpush.msra.mxu0 0.0
      %201 = vmatpush.msra.mxu0 0.0
      %202 = vmatpush.msra.mxu0 0.0
      %203 = vmatpush.msra.mxu0 0.0
      %204 = vmatpush.msra.mxu0 0.0
      %205 = vmatpush.msra.mxu0 0.0
      %206 = vmatpush.msra.mxu0 0.0
      %207 = vmatpush.msra.mxu0 0.0
      %208 = vmatpush.msra.mxu0 0.0
      %209 = vmatpush.msra.mxu0 %v192
      %210 = vmatpush.msra.mxu0 %v190
      %211 = vmatpush.msra.mxu0 %v188
      %212 = vmatpush.msra.mxu0 %v186
      %213 = vmatpush.msra.mxu0 %v184
      %214 = vmatmul.f32.gmra.mxu0 %v196
      %v215 = vpop.f32.mrf.mxu0
      %v216 = vadd.f32 0.0, %v215
      %217 = vdwg.mxu0
      %218 = vmatpush.msra.mxu0 0.0
      %219 = vmatpush.msra.mxu0 0.0
      %220 = vmatpush.msra.mxu0 0.0
      %221 = vmatpush.msra.mxu0 0.0
      %222 = vmatpush.msra.mxu0 0.0
      %223 = vmatpush.msra.mxu0 0.0
      %224 = vmatpush.msra.mxu0 0.0
      %225 = vmatpush.msra.mxu0 0.0
      %226 = vmatpush.msra.mxu0 0.0
      %227 = vmatpush.msra.mxu0 0.0
      %228 = vmatpush.msra.mxu0 0.0
      %229 = vmatpush.msra.mxu0 %v193
      %230 = vmatpush.msra.mxu0 %v191
      %231 = vmatpush.msra.mxu0 %v189
      %232 = vmatpush.msra.mxu0 %v187
      %233 = vmatpush.msra.mxu0 %v185
      %234 = vmatmul.f32.gmra.mxu0 %v196
      %v235 = vpop.f32.mrf.mxu0
      %v236 = vadd.f32 0.0, %v235
      %237 = vdwg.mxu0
      %vm238 = vcmask 1043456
      %v239 = vsel %vm238, %v216, 0.0
      %v240 = vsel %vm238, %v236, 0.0
      %v241 = vadd.f32 %v239, %v240
      %242 = vadd.xlane.f32.xlu0 %v241
      %v243 = vpop.xlane.xlu0 %242
      %v244 = vrcp.pop 256.0
      %v245 = vmul.f32 256.0, %v244
      %v246 = vsub.f32 1.0, %v245
      %v247 = vmul.f32 %v244, %v246
      %v248 = vadd.f32 %v244, %v247
      %vm249 = vweird.f32 %v244
      %v250 = vsel %vm249, %v244, %v248
      %v251 = vmul.f32 %v243, %v250
      %v252 = vsub.f32 %v216, %v251
      %v253 = vsub.f32 %v236, %v251
      %v254 = vmul.f32 %v252, %v252
      %v255 = vmul.f32 %v253, %v253
      %v256 = vsel %vm238, %v254, 0.0
      %v257 = vsel %vm238, %v255, 0.0
      %v258 = vadd.f32 %v256, %v257
      %259 = vadd.xlane.f32.xlu0 %v258
      %v260 = vpop.xlane.xlu0 %259
      %v261 = vmul.f32 %v260, %v250
      %v262 = vadd.f32 %v261, 1e-05
      %v263 = vrsqrt.pop %v262
      %v264 = vmul.f32 %v263, %v262
      %v265 = vmul.f32 %v264, %v263
      %v266 = vmul.f32 0.5, %v265
      %v267 = vsub.f32 1.5, %v266
      %v268 = vmul.f32 %v263, %v267
      %vm269 = vweird.f32 %v262
      %vm270 = vweird.f32 %v263
      %vm271 = vmor %vm269, %vm270
      %v272 = vsel %vm271, %v263, %v268
      %v273 = vmul.f32 %v252, %v272
      %v274 = vmul.f32 %v253, %v272
      %v275 = vmax.f32 %v273, 0.0
      %v276 = vmax.f32 %v274, 0.0
      %v279 = vrot.slane %v276, 4
      %v280 = vsel %vm238, %v275, %v279
      %282 = vst [vmem:[%s182] sm:$0xff] %v280
      %p283 = scmp.lt.s32.totalorder %s17, 1
      %s284 = scalar_select %p283, %s17, 1
      %p285 = scmp.lt.s32.totalorder %s18, 0
      %s286 = scalar_select %p285, %s18, 0
      %s287 = smul.addr %s286, 2
      %s288 = smul.addr %s284, 2
      %s289 = sadd.s32 %s287, %s288
      %s290 = smul.addr %s289, 4
      %s291 = scalar_lea.vmem %s2, %s290
      // Predicated region
      $region29: #{resnet_block_forward.4} parent=27 // pred_check
        %p292 = pneg %p97
      $region30: #{resnet_block_forward.4} parent=27 // pred_check_branch
        %294 = sbr.rel (%p292) target = $region32
      $region31: #{resnet_block_forward.4} parent=27 // pred_region
        _
      $region32: #{resnet_block_forward.4} parent=27 // pred_fallthru
        _
    $region28: #{resnet_block_forward.4} parent=5 // pred_fallthru
      _
    %p295 = scmp.le.s32.totalorder 2, %s8
    // Predicated region
    $region33: #{resnet_block_forward.4} parent=5 // pred_check
      %p296 = pneg %p295
    $region34: #{resnet_block_forward.4} parent=5 // pred_check_branch
      %298 = sbr.rel (%p296) target = $region36
    $region35: #{resnet_block_forward.4} parent=5 // pred_region
      %s299 = ssub.s32 %s8, 2
      // Predicated region
      $region37: #{resnet_block_forward.4} parent=35 // pred_check
        %p300 = pneg %p103
      $region38: #{resnet_block_forward.4} parent=35 // pred_check_branch
        %302 = sbr.rel (%p300) target = $region40
      $region39: #{resnet_block_forward.4} parent=35 // pred_region
        %p303 = scmp.lt.s32.totalorder %s19, 1
        %s304 = scalar_select %p303, %s19, 1
        %p305 = scmp.lt.s32.totalorder %s20, 0
        %s306 = scalar_select %p305, %s20, 0
        %s307 = smul.addr %s306, 2
        %s308 = smul.addr %s304, 2
        %s309 = sadd.s32 %s307, %s308
        %s310 = smul.addr %s309, 4
        %s311 = scalar_lea.vmem %s2, %s310
      $region40: #{resnet_block_forward.4} parent=35 // pred_fallthru
        _
    $region36: #{resnet_block_forward.4} parent=5 // pred_fallthru
      _
  $region6: #{resnet_block_forward.4} parent=0 // loop_footer
    %s12 = sadd.s32 1, %s8
  $region7: #{resnet_block_forward.4} parent=0 // loop_footer_branch
    %7 = sbr.rel target = $region3
  $region8: #{resnet_block_forward.4} parent=0 // loop_exit
    _

// kernel: resnet_block_forward.5
$region0: #{resnet_block_forward.5}
  #allocation0 [shape = 'u32[]', space=smem, size = 0x4, offset = 0x4, fixed_abs, tag = 'smem constant byte address 0x4 - core index']
  #allocation1 [shape = 'u32[72,128]{1,0:T(1,128)}', space=vmem, size = 0x9000, scoped, tag = 'internal scratch']
  %s0 = inlined_call_operand.vmem [shape: f32[2,40,256], index: 0, kind: input, shape index: {}]
  %s1 = inlined_call_operand.vmem [shape: f32[4,40], index: 1, kind: input, shape index: {}]
  %s2 = inlined_call_operand.vmem [shape: f32[2,4,256], index: 2, kind: input, shape index: {}]
  %s3 = inlined_call_operand.vmem [shape: f32[2,4,256], index: 3, kind: input, shape index: {}]
  %s4 = inlined_call_operand.vmem [shape: f32[2,4,256], index: 4, kind: output, shape index: {}]
  %s5 = sld [smem:[#allocation0]]
  $region49: #{resnet_block_forward.5} parent=0
    _
  %s7 = ssub.s32 1, %s5
  %s8 = scalar_select 0, %s7, %s5
  loop: start=0, step=1, limit=4
  $region2: #{resnet_block_forward.5} parent=0 // loop_pre_header
    _
  $region3: #{resnet_block_forward.5} parent=0 // loop_header
    %s10 = sphi 0, %s14
    %p11 = scmp.ge.s32.totalorder %s10, 4
    %s17 = sphi 0, %s29
    %s18 = sphi 0, %s25
    %s19 = sphi 0, %s17
    %s20 = sphi 0, %s18
    %s21 = sphi 0, %s19
    %s22 = sphi 0, %s20
    %s32 = sphi 0, %s34
    %s35 = sphi 0, %s32
    %s36 = sphi 0, %s35
    %s52 = sphi 0, %s36
    %s58 = sphi 0, %s60
    %s61 = sphi 0, %s58
    %s62 = sphi 0, %s61
    %s78 = sphi 0, %s62
    %s86 = sphi 0, %s88
    %s89 = sphi 0, %s86
    %s90 = sphi 0, %s89
    %s106 = sphi 0, %s90
    %s114 = sphi 0, %s116
    %s117 = sphi 0, %s114
    %s118 = sphi 0, %s117
    %s134 = sphi 0, %s118
    %s142 = sphi 0, %s144
    %s145 = sphi 0, %s142
    %s146 = sphi 0, %s145
    %s162 = sphi 0, %s146
  $region4: #{resnet_block_forward.5} parent=0 // loop_header_branch
    %13 = sbr.rel (%p11) target = $region8
  $region5: #{resnet_block_forward.5} parent=0 // loop_body
    %s15 = ssub.s32 %s10, 1
    %s16 = ssub.s32 %s10, 2
    %s23 = sadd.s32 1, %s18
    %p24 = scmp.ge.s32.totalorder %s23, 1
    %s25 = scalar_select %p24, 0, %s23
    %s26 = sadd.s32 1, %s17
    %s27 = scalar_select %p24, %s26, %s17
    %p28 = scmp.ge.s32.totalorder %s27, 2
    %s29 = scalar_select %p28, 0, %s27
    %s30 = ssub.s32 %s17, %s29
    %p31 = scmp.eq.s32.totalorder %s30, 0
    %s33 = sadd.s32 %s32, 1
    %s34 = scalar_select %p31, %s32, %s33
    %p37 = pneg %p31
    %p38 = scmp.eq.s32.totalorder %s10, 1
    %p39 = por %p37, %p38
    %p40 = scmp.ne.s32.totalorder %s32, %s35
    %p41 = scmp.eq.s32.totalorder %s10, 0
    %p42 = por %p40, %p41
    %p43 = scmp.ne.s32.totalorder %s32, %s35
    %p44 = scmp.eq.s32.totalorder %s15, 1
    %p45 = por %p43, %p44
    %p46 = scmp.ne.s32.totalorder %s35, %s36
    %p47 = scmp.eq.s32.totalorder %s15, 0
    %p48 = por %p46, %p47
    %p49 = scmp.ne.s32.totalorder %s35, %s36
    %p50 = scmp.eq.s32.totalorder %s16, 1
    %p51 = por %p49, %p50
    %p53 = scmp.ne.s32.totalorder %s36, %s52
    %p54 = scmp.eq.s32.totalorder %s16, 0
    %p55 = por %p53, %p54
    %s56 = ssub.s32 %s18, %s25
    %p57 = scmp.eq.s32.totalorder %s56, 0
    %s59 = sadd.s32 %s58, 1
    %s60 = scalar_select %p57, %s58, %s59
    %p63 = pneg %p57
    %p64 = scmp.eq.s32.totalorder %s10, 1
    %p65 = por %p63, %p64
    %p66 = scmp.ne.s32.totalorder %s58, %s61
    %p67 = scmp.eq.s32.totalorder %s10, 0
    %p68 = por %p66, %p67
    %p69 = scmp.ne.s32.totalorder %s58, %s61
    %p70 = scmp.eq.s32.totalorder %s15, 1
    %p71 = por %p69, %p70
    %p72 = scmp.ne.s32.totalorder %s61, %s62
    %p73 = scmp.eq.s32.totalorder %s15, 0
    %p74 = por %p72, %p73
    %p75 = scmp.ne.s32.totalorder %s61, %s62
    %p76 = scmp.eq.s32.totalorder %s16, 1
    %p77 = por %p75, %p76
    %p79 = scmp.ne.s32.totalorder %s62, %s78
    %p80 = scmp.eq.s32.totalorder %s16, 0
    %p81 = por %p79, %p80
    %s82 = ssub.s32 %s17, %s29
    %s83 = ssub.s32 %s18, %s25
    %s84 = sor.u32 %s82, %s83
    %p85 = scmp.eq.s32.totalorder %s84, 0
    %s87 = sadd.s32 %s86, 1
    %s88 = scalar_select %p85, %s86, %s87
    %p91 = pneg %p85
    %p92 = scmp.eq.s32.totalorder %s10, 1
    %p93 = por %p91, %p92
    %p94 = scmp.ne.s32.totalorder %s86, %s89
    %p95 = scmp.eq.s32.totalorder %s10, 0
    %p96 = por %p94, %p95
    %p97 = scmp.ne.s32.totalorder %s86, %s89
    %p98 = scmp.eq.s32.totalorder %s15, 1
    %p99 = por %p97, %p98
    %p100 = scmp.ne.s32.totalorder %s89, %s90
    %p101 = scmp.eq.s32.totalorder %s15, 0
    %p102 = por %p100, %p101
    %p103 = scmp.ne.s32.totalorder %s89, %s90
    %p104 = scmp.eq.s32.totalorder %s16, 1
    %p105 = por %p103, %p104
    %p107 = scmp.ne.s32.totalorder %s90, %s106
    %p108 = scmp.eq.s32.totalorder %s16, 0
    %p109 = por %p107, %p108
    %s110 = ssub.s32 %s17, %s29
    %s111 = ssub.s32 %s18, %s25
    %s112 = sor.u32 %s110, %s111
    %p113 = scmp.eq.s32.totalorder %s112, 0
    %s115 = sadd.s32 %s114, 1
    %s116 = scalar_select %p113, %s114, %s115
    %p119 = pneg %p113
    %p120 = scmp.eq.s32.totalorder %s10, 1
    %p121 = por %p119, %p120
    %p122 = scmp.ne.s32.totalorder %s114, %s117
    %p123 = scmp.eq.s32.totalorder %s10, 0
    %p124 = por %p122, %p123
    %p125 = scmp.ne.s32.totalorder %s114, %s117
    %p126 = scmp.eq.s32.totalorder %s15, 1
    %p127 = por %p125, %p126
    %p128 = scmp.ne.s32.totalorder %s117, %s118
    %p129 = scmp.eq.s32.totalorder %s15, 0
    %p130 = por %p128, %p129
    %p131 = scmp.ne.s32.totalorder %s117, %s118
    %p132 = scmp.eq.s32.totalorder %s16, 1
    %p133 = por %p131, %p132
    %p135 = scmp.ne.s32.totalorder %s118, %s134
    %p136 = scmp.eq.s32.totalorder %s16, 0
    %p137 = por %p135, %p136
    %s138 = ssub.s32 %s17, %s29
    %s139 = ssub.s32 %s18, %s25
    %s140 = sor.u32 %s138, %s139
    %p141 = scmp.eq.s32.totalorder %s140, 0
    %s143 = sadd.s32 %s142, 1
    %s144 = scalar_select %p141, %s142, %s143
    %p147 = pneg %p141
    %p148 = scmp.eq.s32.totalorder %s10, 1
    %p149 = por %p147, %p148
    %p150 = scmp.ne.s32.totalorder %s142, %s145
    %p151 = scmp.eq.s32.totalorder %s10, 0
    %p152 = por %p150, %p151
    %p153 = scmp.ne.s32.totalorder %s142, %s145
    %p154 = scmp.eq.s32.totalorder %s15, 1
    %p155 = por %p153, %p154
    %p156 = scmp.ne.s32.totalorder %s145, %s146
    %p157 = scmp.eq.s32.totalorder %s15, 0
    %p158 = por %p156, %p157
    %p159 = scmp.ne.s32.totalorder %s145, %s146
    %p160 = scmp.eq.s32.totalorder %s16, 1
    %p161 = por %p159, %p160
    %p163 = scmp.ne.s32.totalorder %s146, %s162
    %p164 = scmp.eq.s32.totalorder %s16, 0
    %p165 = por %p163, %p164
    %p166 = scmp.le.s32.totalorder 1, %s10
    %p167 = scmp.lt.s32.totalorder %s10, 3
    %p168 = pnand %p166, %p167
    %p169 = pneg %p168
    // Predicated region
    $region9: #{resnet_block_forward.5} parent=5 // pred_check
      _
    $region10: #{resnet_block_forward.5} parent=5 // pred_check_branch
      %171 = sbr.rel (%p168) target = $region12
    $region11: #{resnet_block_forward.5} parent=5 // pred_region
      %s172 = ssub.s32 %s10, 1
      // Predicated region
      $region13: #{resnet_block_forward.5} parent=11 // pred_check
        %p173 = pneg %p74
      $region14: #{resnet_block_forward.5} parent=11 // pred_check_branch
        %175 = sbr.rel (%p173) target = $region16
      $region15: #{resnet_block_forward.5} parent=11 // pred_region
        %p176 = scmp.lt.s32.totalorder %s20, 0
        %s177 = scalar_select %p176, %s20, 0
        %s178 = smul.addr %s177, 4
        %s179 = scalar_lea.vmem %s1, %s178
      $region16: #{resnet_block_forward.5} parent=11 // pred_fallthru
        _
    $region12: #{resnet_block_forward.5} parent=5 // pred_fallthru
      _
    %p180 = scmp.lt.s32.totalorder %s10, 2
    // Predicated region
    $region17: #{resnet_block_forward.5} parent=5 // pred_check
      %p181 = pneg %p180
    $region18: #{resnet_block_forward.5} parent=5 // pred_check_branch
      %183 = sbr.rel (%p181) target = $region20
    $region19: #{resnet_block_forward.5} parent=5 // pred_region
      // Predicated region
      $region21: #{resnet_block_forward.5} parent=19 // pred_check
        %p184 = pneg %p42
      $region22: #{resnet_block_forward.5} parent=19 // pred_check_branch
        %186 = sbr.rel (%p184) target = $region24
      $region23: #{resnet_block_forward.5} parent=19 // pred_region
        %p187 = scmp.lt.s32.totalorder %s17, 1
        %s188 = scalar_select %p187, %s17, 1
        %s189 = smul.addr %s188, 10
        %s190 = smul.addr %s189, 8
        %s191 = scalar_lea.vmem %s0, %s190
      $region24: #{resnet_block_forward.5} parent=19 // pred_fallthru
        _
      // Predicated region
      $region25: #{resnet_block_forward.5} parent=19 // pred_check
        %p192 = pneg %p96
      $region26: #{resnet_block_forward.5} parent=19 // pred_check_branch
        %194 = sbr.rel (%p192) target = $region28
      $region27: #{resnet_block_forward.5} parent=19 // pred_region
        %p195 = scmp.lt.s32.totalorder %s17, 1
        %s196 = scalar_select %p195, %s17, 1
        %p197 = scmp.lt.s32.totalorder %s18, 0
        %s198 = scalar_select %p197, %s18, 0
        %s199 = smul.addr %s198, 2
        %s200 = smul.addr %s196, 2
        %s201 = sadd.s32 %s199, %s200
        %s202 = smul.addr %s201, 4
        %s203 = scalar_lea.vmem %s2, %s202
      $region28: #{resnet_block_forward.5} parent=19 // pred_fallthru
        _
      // Predicated region
      $region29: #{resnet_block_forward.5} parent=19 // pred_check
        %p204 = pneg %p124
      $region30: #{resnet_block_forward.5} parent=19 // pred_check_branch
        %206 = sbr.rel (%p204) target = $region32
      $region31: #{resnet_block_forward.5} parent=19 // pred_region
        %p207 = scmp.lt.s32.totalorder %s17, 1
        %s208 = scalar_select %p207, %s17, 1
        %p209 = scmp.lt.s32.totalorder %s18, 0
        %s210 = scalar_select %p209, %s18, 0
        %s211 = smul.addr %s210, 2
        %s212 = smul.addr %s208, 2
        %s213 = sadd.s32 %s211, %s212
        %s214 = smul.addr %s213, 4
        %s215 = scalar_lea.vmem %s3, %s214
      $region32: #{resnet_block_forward.5} parent=19 // pred_fallthru
        _
    $region20: #{resnet_block_forward.5} parent=5 // pred_fallthru
      _
    %p216 = scmp.le.s32.totalorder 1, %s10
    %p217 = scmp.lt.s32.totalorder %s10, 3
    %p218 = pnand %p216, %p217
    %p219 = pneg %p218
    // Predicated region
    $region33: #{resnet_block_forward.5} parent=5 // pred_check
      _
    $region34: #{resnet_block_forward.5} parent=5 // pred_check_branch
      %221 = sbr.rel (%p218) target = $region36
    $region35: #{resnet_block_forward.5} parent=5 // pred_region
      %s222 = ssub.s32 %s10, 1
      %p223 = scmp.lt.s32.totalorder %s19, 1
      %s224 = scalar_select %p223, %s19, 1
      %s225 = smul.addr %s224, 10
      %s226 = smul.addr %s225, 8
      %s227 = scalar_lea.vmem %s0, %s226
      %p228 = pneg %p48
      %p229 = pneg %p45
      %p230 = scmp.lt.s32.totalorder %s20, 0
      %s231 = scalar_select %p230, %s20, 0
      %s232 = smul.addr %s231, 4
      %s233 = scalar_lea.vmem %s1, %s232
      %p234 = pneg %p74
      %p235 = pneg %p71
      %p236 = scmp.lt.s32.totalorder %s19, 1
      %s237 = scalar_select %p236, %s19, 1
      %p238 = scmp.lt.s32.totalorder %s20, 0
      %s239 = scalar_select %p238, %s20, 0
      %s240 = smul.addr %s239, 2
      %s241 = smul.addr %s237, 2
      %s242 = sadd.s32 %s240, %s241
      %s243 = smul.addr %s242, 4
      %s244 = scalar_lea.vmem %s2, %s243
      %p245 = pneg %p102
      %p246 = pneg %p99
      %p247 = scmp.lt.s32.totalorder %s19, 1
      %s248 = scalar_select %p247, %s19, 1
      %p249 = scmp.lt.s32.totalorder %s20, 0
      %s250 = scalar_select %p249, %s20, 0
      %s251 = smul.addr %s250, 2
      %s252 = smul.addr %s248, 2
      %s253 = sadd.s32 %s251, %s252
      %s254 = smul.addr %s253, 4
      %s255 = scalar_lea.vmem %s3, %s254
      %p256 = pneg %p130
      %p257 = pneg %p127
      %p258 = pneg %p158
      %p259 = pneg %p155
      %p260 = scmp.lt.s32.totalorder %s19, 1
      %s261 = scalar_select %p260, %s19, 1
      %p262 = scmp.lt.s32.totalorder %s20, 0
      %s263 = scalar_select %p262, %s20, 0
      %s264 = smul.addr %s263, 2
      %s265 = smul.addr %s261, 2
      %s266 = sadd.s32 %s264, %s265
      %s267 = smul.addr %s266, 4
      %s268 = scalar_lea.vmem %s4, %s267
      %p269 = scmp.lt.s32.totalorder %s19, 1
      %s270 = scalar_select %p269, %s19, 1
      %s271 = smul.addr %s270, 10
      %s272 = smul.addr %s271, 8
      %s273 = scalar_lea.vmem %s0, %s272
      %p274 = scmp.lt.s32.totalorder %s20, 0
      %s275 = scalar_select %p274, %s20, 0
      %s276 = smul.addr %s275, 4
      %s277 = scalar_lea.vmem %s1, %s276
      %p278 = scmp.lt.s32.totalorder %s19, 1
      %s279 = scalar_select %p278, %s19, 1
      %p280 = scmp.lt.s32.totalorder %s20, 0
      %s281 = scalar_select %p280, %s20, 0
      %s282 = smul.addr %s281, 2
      %s283 = smul.addr %s279, 2
      %s284 = sadd.s32 %s282, %s283
      %s285 = smul.addr %s284, 4
      %s286 = scalar_lea.vmem %s2, %s285
      %p287 = scmp.lt.s32.totalorder %s19, 1
      %s288 = scalar_select %p287, %s19, 1
      %p289 = scmp.lt.s32.totalorder %s20, 0
      %s290 = scalar_select %p289, %s20, 0
      %s291 = smul.addr %s290, 2
      %s292 = smul.addr %s288, 2
      %s293 = sadd.s32 %s291, %s292
      %s294 = smul.addr %s293, 4
      %s295 = scalar_lea.vmem %s3, %s294
      %p296 = scmp.lt.s32.totalorder %s19, 1
      %s297 = scalar_select %p296, %s19, 1
      %p298 = scmp.lt.s32.totalorder %s20, 0
      %s299 = scalar_select %p298, %s20, 0
      %s300 = smul.addr %s299, 2
      %s301 = smul.addr %s297, 2
      %s302 = sadd.s32 %s300, %s301
      %s303 = smul.addr %s302, 4
      %s304 = scalar_lea.vmem %s4, %s303
      %v305 = vld [vmem:[%s277] sm:$0xf]
      %v306 = vld [vmem:[%s273] sm:$0xff]
      %v307 = vld [vmem:[%s273 + $0x8] sm:$0xff]
      %v308 = vld [vmem:[%s273 + $0x10] sm:$0xff]
      %v309 = vld [vmem:[%s273 + $0x18] sm:$0xff]
      %v310 = vld [vmem:[%s273 + $0x20] sm:$0xff]
      %v311 = vld [vmem:[%s273 + $0x28] sm:$0xff]
      %v312 = vld [vmem:[%s273 + $0x30] sm:$0xff]
      %v313 = vld [vmem:[%s273 + $0x38] sm:$0xff]
      %v314 = vld [vmem:[%s273 + $0x40] sm:$0xff]
      %v315 = vld [vmem:[%s273 + $0x48] sm:$0xff]
      %vm316 = vcmask 326656
      %v318 = vsel %vm316, %v305, 0
      %320 = vmatpush.msra.mxu0 0.0
      %321 = vmatpush.msra.mxu0 0.0
      %322 = vmatpush.msra.mxu0 0.0
      %323 = vmatpush.msra.mxu0 0.0
      %324 = vmatpush.msra.mxu0 0.0
      %325 = vmatpush.msra.mxu0 0.0
      %326 = vmatpush.msra.mxu0 0.0
      %327 = vmatpush.msra.mxu0 0.0
      %328 = vmatpush.msra.mxu0 0.0
      %329 = vmatpush.msra.mxu0 0.0
      %330 = vmatpush.msra.mxu0 0.0
      %331 = vmatpush.msra.mxu0 %v314
      %332 = vmatpush.msra.mxu0 %v312
      %333 = vmatpush.msra.mxu0 %v310
      %334 = vmatpush.msra.mxu0 %v308
      %335 = vmatpush.msra.mxu0 %v306
      %336 = vmatmul.f32.gmra.mxu0 %v318
      %v337 = vpop.f32.mrf.mxu0
      %v338 = vadd.f32 0.0, %v337
      %339 = vdwg.mxu0
      %340 = vmatpush.msra.mxu0 0.0
      %341 = vmatpush.msra.mxu0 0.0
      %342 = vmatpush.msra.mxu0 0.0
      %343 = vmatpush.msra.mxu0 0.0
      %344 = vmatpush.msra.mxu0 0.0
      %345 = vmatpush.msra.mxu0 0.0
      %346 = vmatpush.msra.mxu0 0.0
      %347 = vmatpush.msra.mxu0 0.0
      %348 = vmatpush.msra.mxu0 0.0
      %349 = vmatpush.msra.mxu0 0.0
      %350 = vmatpush.msra.mxu0 0.0
      %351 = vmatpush.msra.mxu0 %v315
      %352 = vmatpush.msra.mxu0 %v313
      %353 = vmatpush.msra.mxu0 %v311
      %354 = vmatpush.msra.mxu0 %v309
      %355 = vmatpush.msra.mxu0 %v307
      %356 = vmatmul.f32.gmra.mxu0 %v318
      %v357 = vpop.f32.mrf.mxu0
      %v358 = vadd.f32 0.0, %v357
      %359 = vdwg.mxu0
      %vm360 = vcmask 1043456
      %v361 = vsel %vm360, %v338, 0.0
      %v362 = vsel %vm360, %v358, 0.0
      %v363 = vadd.f32 %v361, %v362
      %364 = vadd.xlane.f32.xlu0 %v363
      %v365 = vpop.xlane.xlu0 %364
      %v366 = vrcp.pop 256.0
      %v367 = vmul.f32 256.0, %v366
      %v368 = vsub.f32 1.0, %v367
      %v369 = vmul.f32 %v366, %v368
      %v370 = vadd.f32 %v366, %v369
      %vm371 = vweird.f32 %v366
      %v372 = vsel %vm371, %v366, %v370
      %v373 = vmul.f32 %v365, %v372
      %v374 = vsub.f32 %v338, %v373
      %v375 = vsub.f32 %v358, %v373
      %v376 = vmul.f32 %v374, %v374
      %v377 = vmul.f32 %v375, %v375
      %v378 = vsel %vm360, %v376, 0.0
      %v379 = vsel %vm360, %v377, 0.0
      %v380 = vadd.f32 %v378, %v379
      %381 = vadd.xlane.f32.xlu0 %v380
      %v382 = vpop.xlane.xlu0 %381
      %v383 = vmul.f32 %v382, %v372
      %v384 = vadd.f32 %v383, 1e-05
      %v385 = vrsqrt.pop %v384
      %v386 = vmul.f32 %v385, %v384
      %v387 = vmul.f32 %v386, %v385
      %v388 = vmul.f32 0.5, %v387
      %v389 = vsub.f32 1.5, %v388
      %v390 = vmul.f32 %v385, %v389
      %vm391 = vweird.f32 %v384
      %vm392 = vweird.f32 %v385
      %vm393 = vmor %vm391, %vm392
      %v394 = vsel %vm393, %v385, %v390
      %v395 = vmul.f32 %v374, %v394
      %v396 = vmul.f32 %v375, %v394
      %v397 = vld [vmem:[%s286] sm:$0xff]
      %v398 = vld [vmem:[%s295] sm:$0xff]
      %v399 = vadd.f32 %v397, %v398
      %v402 = vrot.slane %v396, 4
      %v403 = vsel %vm360, %v395, %v402
      %v405 = vadd.f32 %v399, %v403
      %406 = vst [vmem:[%s304] sm:$0xff] %v405
      %p407 = scmp.lt.s32.totalorder %s19, 1
      %s408 = scalar_select %p407, %s19, 1
      %p409 = scmp.lt.s32.totalorder %s20, 0
      %s410 = scalar_select %p409, %s20, 0
      %s411 = smul.addr %s410, 2
      %s412 = smul.addr %s408, 2
      %s413 = sadd.s32 %s411, %s412
      %s414 = smul.addr %s413, 4
      %s415 = scalar_lea.vmem %s4, %s414
      // Predicated region
      $region37: #{resnet_block_forward.5} parent=35 // pred_check
        %p416 = pneg %p155
      $region38: #{resnet_block_forward.5} parent=35 // pred_check_branch
        %418 = sbr.rel (%p416) target = $region40
      $region39: #{resnet_block_forward.5} parent=35 // pred_region
        _
      $region40: #{resnet_block_forward.5} parent=35 // pred_fallthru
        _
    $region36: #{resnet_block_forward.5} parent=5 // pred_fallthru
      _
    %p419 = scmp.le.s32.totalorder 2, %s10
    // Predicated region
    $region41: #{resnet_block_forward.5} parent=5 // pred_check
      %p420 = pneg %p419
    $region42: #{resnet_block_forward.5} parent=5 // pred_check_branch
      %422 = sbr.rel (%p420) target = $region44
    $region43: #{resnet_block_forward.5} parent=5 // pred_region
      %s423 = ssub.s32 %s10, 2
      // Predicated region
      $region45: #{resnet_block_forward.5} parent=43 // pred_check
        %p424 = pneg %p161
      $region46: #{resnet_block_forward.5} parent=43 // pred_check_branch
        %426 = sbr.rel (%p424) target = $region48
      $region47: #{resnet_block_forward.5} parent=43 // pred_region
        %p427 = scmp.lt.s32.totalorder %s21, 1
        %s428 = scalar_select %p427, %s21, 1
        %p429 = scmp.lt.s32.totalorder %s22, 0
        %s430 = scalar_select %p429, %s22, 0
        %s431 = smul.addr %s430, 2
        %s432 = smul.addr %s428, 2
        %s433 = sadd.s32 %s431, %s432
        %s434 = smul.addr %s433, 4
        %s435 = scalar_lea.vmem %s4, %s434
      $region48: #{resnet_block_forward.5} parent=43 // pred_fallthru
        _
    $region44: #{resnet_block_forward.5} parent=5 // pred_fallthru
      _
  $region6: #{resnet_block_forward.5} parent=0 // loop_footer
    %s14 = sadd.s32 1, %s10
  $region7: #{resnet_block_forward.5} parent=0 // loop_footer_branch
    %9 = sbr.rel target = $region3
  $region8: #{resnet_block_forward.5} parent=0 // loop_exit
    _

</llo_original>
